<compile_context>
chip_gen: v6e
topology: v6e:2x2x1
jax: 0.10.0
libtpu: 0.0.40
codegen_flags: <defaults>
</compile_context>

<pallas_src>
import functools
import math

import jax
import jax.numpy as jnp
from jax import lax
from jax.experimental import pallas as pl
from jax.experimental.pallas import tpu as pltpu

HIDDEN = 100        # logical hidden size (matches PyTorch nn.Linear(…, 100))
HIDDEN_PAD = 128    # lane-aligned hidden size used inside the kernel
LANE = 128
SUBLANE = 8
_SQRT_HALF = 1.0 / math.sqrt(2.0)


def _gelu_exact(x):
    # PyTorch F.gelu default = exact erf-based GELU
    return 0.5 * x * (1.0 + lax.erf(x * _SQRT_HALF))


def _round_up(n, m):
    return ((n + m - 1) // m) * m


def _pad2d(a, rows, cols):
    pr, pc = rows - a.shape[0], cols - a.shape[1]
    if pr == 0 and pc == 0:
        return a
    return jnp.pad(a, ((0, pr), (0, pc)))


def qnetwork_kernel(x_ref, w1_ref, b1_ref, w2_ref, b2_ref,
                    w3_ref, b3_ref, w4_ref, b4_ref, out_ref):
    # Explicit HIGHEST precision: true-f32 matmuls (documented accuracy/perf trade).
    dot = functools.partial(jnp.dot, preferred_element_type=jnp.float32,
                            precision=lax.Precision.HIGHEST)
    x = x_ref[...]
    h = _gelu_exact(dot(x, w1_ref[...]) + b1_ref[...])
    h = _gelu_exact(dot(h, w2_ref[...]) + b2_ref[...])
    h = _gelu_exact(dot(h, w3_ref[...]) + b3_ref[...])
    out_ref[...] = (dot(h, w4_ref[...]) + b4_ref[...]).astype(out_ref.dtype)


def qnetwork_forward(x, params, *, batch_tile=512):
    """x: (B, input_dim) float32. params: w1..w4 (in,out), b1..b4 (1,out), unpadded."""
    B, d_in = x.shape
    out_dim = params["w4"].shape[1]
    out_pad = _round_up(out_dim, LANE)

    # Zero-pad weights/biases to lane-aligned shapes (GELU(0)=0 keeps pad lanes zero).
    w1 = _pad2d(params["w1"], d_in, HIDDEN_PAD)
    b1 = _pad2d(params["b1"], 1, HIDDEN_PAD)
    w2 = _pad2d(params["w2"], HIDDEN_PAD, HIDDEN_PAD)
    b2 = _pad2d(params["b2"], 1, HIDDEN_PAD)
    w3 = _pad2d(params["w3"], HIDDEN_PAD, HIDDEN_PAD)
    b3 = _pad2d(params["b3"], 1, HIDDEN_PAD)
    w4 = _pad2d(params["w4"], HIDDEN_PAD, out_pad)
    b4 = _pad2d(params["b4"], 1, out_pad)

    # Batch tiling: small batches run in one step; large batches tile at
    # `batch_tile` rows (multiple of 8, >=256 recommended) so the MXU sees
    # full-height tiles and x/out DMAs double-buffer.
    if B <= batch_tile:
        tb = _round_up(max(B, SUBLANE), SUBLANE)
    else:
        tb = batch_tile
    b_pad = _round_up(B, tb)
    if b_pad != B:
        x = jnp.pad(x, ((0, b_pad - B), (0, 0)))
    grid = (b_pad // tb,)

    # Weights/biases stay VMEM-resident across all batch tiles.
    resident = lambda a: pl.BlockSpec(a.shape, lambda i: (0, 0))
    in_specs = [
        pl.BlockSpec((tb, d_in), lambda i: (i, 0)),
        resident(w1), resident(b1),
        resident(w2), resident(b2),
        resident(w3), resident(b3),
        resident(w4), resident(b4),
    ]
    out_specs = pl.BlockSpec((tb, out_pad), lambda i: (i, 0))

    out_padded = pl.pallas_call(
        qnetwork_kernel,
        out_shape=jax.ShapeDtypeStruct((b_pad, out_pad), jnp.float32),
        grid=grid,
        in_specs=in_specs,
        out_specs=out_specs,
        compiler_params=pltpu.CompilerParams(
            dimension_semantics=("parallel",)),  # shard batch tiles across TCs (v7x)
    )(x, w1, b1, w2, b2, w3, b3, w4, b4)

    return out_padded[:B, :out_dim]


def init_params(key, input_dim, output_dim):
    """Deterministic PyTorch-style uniform(-1/sqrt(fan_in), 1/sqrt(fan_in)) init."""
    dims = [(input_dim, HIDDEN), (HIDDEN, HIDDEN), (HIDDEN, HIDDEN), (HIDDEN, output_dim)]
    params = {}
    for i, (fan_in, fan_out) in enumerate(dims, start=1):
        key, kw, kb = jax.random.split(key, 3)
        bound = 1.0 / math.sqrt(fan_in)
        params[f"w{i}"] = jax.random.uniform(
            kw, (fan_in, fan_out), jnp.float32, minval=-bound, maxval=bound)
        params[f"b{i}"] = jax.random.uniform(
            kb, (1, fan_out), jnp.float32, minval=-bound, maxval=bound)
    return params


def reference_forward(x, params):
    h = x
    for i in range(1, 4):
        h = jax.nn.gelu(
            jnp.dot(h, params[f"w{i}"], precision=lax.Precision.HIGHEST)
            + params[f"b{i}"],
            approximate=False)
    return jnp.dot(h, params["w4"], precision=lax.Precision.HIGHEST) + params["b4"]


if __name__ == "__main__":
    key = jax.random.PRNGKey(0)
    k_x, k_p = jax.random.split(key)

    batch, input_dim, output_dim = 8, 32, 4
    x = jax.random.normal(k_x, (batch, input_dim), jnp.float32)
    params = init_params(k_p, input_dim, output_dim)

    out = qnetwork_forward(x, params)
    out = jax.block_until_ready(out)

    ref = reference_forward(x, params)
    assert out.shape == (batch, output_dim)
    assert jnp.allclose(out, ref, atol=1e-4, rtol=1e-4), "mismatch vs reference"

    print("KERNEL_OK")
</pallas_src>

<mosaic_0001>
module attributes {stable_mosaic.version = 11 : i64} {
  func.func @qnetwork_kernel(%arg0: i32, %arg1: memref<8x32xf32, #tpu.memory_space<vmem>>, %arg2: memref<32x128xf32, #tpu.memory_space<vmem>>, %arg3: memref<1x128xf32, #tpu.memory_space<vmem>>, %arg4: memref<128x128xf32, #tpu.memory_space<vmem>>, %arg5: memref<1x128xf32, #tpu.memory_space<vmem>>, %arg6: memref<128x128xf32, #tpu.memory_space<vmem>>, %arg7: memref<1x128xf32, #tpu.memory_space<vmem>>, %arg8: memref<128x128xf32, #tpu.memory_space<vmem>>, %arg9: memref<1x128xf32, #tpu.memory_space<vmem>>, %arg10: memref<8x128xf32, #tpu.memory_space<vmem>>) attributes {dimension_semantics = [#tpu.dimension_semantics<parallel>], iteration_bounds = array<i64: 1>, scalar_prefetch = 0 : i64, scratch_operands = 0 : i64, tpu.core_type = #tpu.core_type<tc>, window_params = [{transform_indices = @transform_0, window_bounds = array<i64: 8, 32>}, {pipeline_mode = #tpu.pipeline_mode<synchronous>, transform_indices = @transform_1, window_bounds = array<i64: 32, 128>}, {pipeline_mode = #tpu.pipeline_mode<synchronous>, transform_indices = @transform_2, window_bounds = array<i64: 1, 128>}, {pipeline_mode = #tpu.pipeline_mode<synchronous>, transform_indices = @transform_3, window_bounds = array<i64: 128, 128>}, {pipeline_mode = #tpu.pipeline_mode<synchronous>, transform_indices = @transform_4, window_bounds = array<i64: 1, 128>}, {pipeline_mode = #tpu.pipeline_mode<synchronous>, transform_indices = @transform_5, window_bounds = array<i64: 128, 128>}, {pipeline_mode = #tpu.pipeline_mode<synchronous>, transform_indices = @transform_6, window_bounds = array<i64: 1, 128>}, {pipeline_mode = #tpu.pipeline_mode<synchronous>, transform_indices = @transform_7, window_bounds = array<i64: 128, 128>}, {pipeline_mode = #tpu.pipeline_mode<synchronous>, transform_indices = @transform_8, window_bounds = array<i64: 1, 128>}, {transform_indices = @transform_9, window_bounds = array<i64: 8, 128>}]} {
    %c0 = arith.constant 0 : index
    %c0_0 = arith.constant 0 : index
    %0 = vector.load %arg1[%c0, %c0_0] : memref<8x32xf32, #tpu.memory_space<vmem>>, vector<8x32xf32>
    %c0_1 = arith.constant 0 : index
    %c0_2 = arith.constant 0 : index
    %1 = vector.load %arg2[%c0_1, %c0_2] : memref<32x128xf32, #tpu.memory_space<vmem>>, vector<32x128xf32>
    %cst = arith.constant dense<0.000000e+00> : vector<8x128xf32>
    %2 = tpu.matmul %0, %1, %cst {dimension_numbers = #tpu.dot_dimension_numbers<[1], [0], [0], [1], [0, 0, 1, 1], [], []>, precision = #tpu.contract_precision<fp32>} : vector<8x32xf32>, vector<32x128xf32>, vector<8x128xf32> -> vector<8x128xf32>
    %c0_3 = arith.constant 0 : index
    %c0_4 = arith.constant 0 : index
    %3 = vector.load %arg3[%c0_3, %c0_4] : memref<1x128xf32, #tpu.memory_space<vmem>>, vector<1x128xf32>
    %4 = vector.broadcast %3 : vector<1x128xf32> to vector<8x128xf32>
    %5 = arith.addf %2, %4 : vector<8x128xf32>
    %cst_5 = arith.constant 5.000000e-01 : f32
    %6 = vector.broadcast %cst_5 : f32 to vector<8x128xf32>
    %7 = arith.mulf %6, %5 : vector<8x128xf32>
    %cst_6 = arith.constant 0.707106769 : f32
    %8 = vector.broadcast %cst_6 : f32 to vector<8x128xf32>
    %9 = arith.mulf %5, %8 : vector<8x128xf32>
    %10 = math.erf %9 : vector<8x128xf32>
    %cst_7 = arith.constant 1.000000e+00 : f32
    %11 = vector.broadcast %cst_7 : f32 to vector<8x128xf32>
    %12 = arith.addf %11, %10 : vector<8x128xf32>
    %13 = arith.mulf %7, %12 : vector<8x128xf32>
    %c0_8 = arith.constant 0 : index
    %c0_9 = arith.constant 0 : index
    %14 = vector.load %arg4[%c0_8, %c0_9] : memref<128x128xf32, #tpu.memory_space<vmem>>, vector<128x128xf32>
    %cst_10 = arith.constant dense<0.000000e+00> : vector<8x128xf32>
    %15 = tpu.matmul %13, %14, %cst_10 {dimension_numbers = #tpu.dot_dimension_numbers<[1], [0], [0], [1], [0, 0, 1, 1], [], []>, precision = #tpu.contract_precision<fp32>} : vector<8x128xf32>, vector<128x128xf32>, vector<8x128xf32> -> vector<8x128xf32>
    %c0_11 = arith.constant 0 : index
    %c0_12 = arith.constant 0 : index
    %16 = vector.load %arg5[%c0_11, %c0_12] : memref<1x128xf32, #tpu.memory_space<vmem>>, vector<1x128xf32>
    %17 = vector.broadcast %16 : vector<1x128xf32> to vector<8x128xf32>
    %18 = arith.addf %15, %17 : vector<8x128xf32>
    %cst_13 = arith.constant 5.000000e-01 : f32
    %19 = vector.broadcast %cst_13 : f32 to vector<8x128xf32>
    %20 = arith.mulf %19, %18 : vector<8x128xf32>
    %cst_14 = arith.constant 0.707106769 : f32
    %21 = vector.broadcast %cst_14 : f32 to vector<8x128xf32>
    %22 = arith.mulf %18, %21 : vector<8x128xf32>
    %23 = math.erf %22 : vector<8x128xf32>
    %cst_15 = arith.constant 1.000000e+00 : f32
    %24 = vector.broadcast %cst_15 : f32 to vector<8x128xf32>
    %25 = arith.addf %24, %23 : vector<8x128xf32>
    %26 = arith.mulf %20, %25 : vector<8x128xf32>
    %c0_16 = arith.constant 0 : index
    %c0_17 = arith.constant 0 : index
    %27 = vector.load %arg6[%c0_16, %c0_17] : memref<128x128xf32, #tpu.memory_space<vmem>>, vector<128x128xf32>
    %cst_18 = arith.constant dense<0.000000e+00> : vector<8x128xf32>
    %28 = tpu.matmul %26, %27, %cst_18 {dimension_numbers = #tpu.dot_dimension_numbers<[1], [0], [0], [1], [0, 0, 1, 1], [], []>, precision = #tpu.contract_precision<fp32>} : vector<8x128xf32>, vector<128x128xf32>, vector<8x128xf32> -> vector<8x128xf32>
    %c0_19 = arith.constant 0 : index
    %c0_20 = arith.constant 0 : index
    %29 = vector.load %arg7[%c0_19, %c0_20] : memref<1x128xf32, #tpu.memory_space<vmem>>, vector<1x128xf32>
    %30 = vector.broadcast %29 : vector<1x128xf32> to vector<8x128xf32>
    %31 = arith.addf %28, %30 : vector<8x128xf32>
    %cst_21 = arith.constant 5.000000e-01 : f32
    %32 = vector.broadcast %cst_21 : f32 to vector<8x128xf32>
    %33 = arith.mulf %32, %31 : vector<8x128xf32>
    %cst_22 = arith.constant 0.707106769 : f32
    %34 = vector.broadcast %cst_22 : f32 to vector<8x128xf32>
    %35 = arith.mulf %31, %34 : vector<8x128xf32>
    %36 = math.erf %35 : vector<8x128xf32>
    %cst_23 = arith.constant 1.000000e+00 : f32
    %37 = vector.broadcast %cst_23 : f32 to vector<8x128xf32>
    %38 = arith.addf %37, %36 : vector<8x128xf32>
    %39 = arith.mulf %33, %38 : vector<8x128xf32>
    %c0_24 = arith.constant 0 : index
    %c0_25 = arith.constant 0 : index
    %40 = vector.load %arg8[%c0_24, %c0_25] : memref<128x128xf32, #tpu.memory_space<vmem>>, vector<128x128xf32>
    %cst_26 = arith.constant dense<0.000000e+00> : vector<8x128xf32>
    %41 = tpu.matmul %39, %40, %cst_26 {dimension_numbers = #tpu.dot_dimension_numbers<[1], [0], [0], [1], [0, 0, 1, 1], [], []>, precision = #tpu.contract_precision<fp32>} : vector<8x128xf32>, vector<128x128xf32>, vector<8x128xf32> -> vector<8x128xf32>
    %c0_27 = arith.constant 0 : index
    %c0_28 = arith.constant 0 : index
    %42 = vector.load %arg9[%c0_27, %c0_28] : memref<1x128xf32, #tpu.memory_space<vmem>>, vector<1x128xf32>
    %43 = vector.broadcast %42 : vector<1x128xf32> to vector<8x128xf32>
    %44 = arith.addf %41, %43 : vector<8x128xf32>
    %c0_29 = arith.constant 0 : index
    %c0_30 = arith.constant 0 : index
    %45 = vector.load %arg10[%c0_29, %c0_30] : memref<8x128xf32, #tpu.memory_space<vmem>>, vector<8x128xf32>
    tpu.vector_store %arg10[%c0_29, %c0_30], %44 {strides = array<i32>} : memref<8x128xf32, #tpu.memory_space<vmem>>, vector<8x128xf32>,
    return
  }
  func.func @transform_0(%arg0: i32) -> (i32, i32) {
    %c0_i32 = arith.constant 0 : i32
    %c0_i32_0 = arith.constant 0 : i32
    return %arg0, %c0_i32 : i32, i32
  }
  func.func @transform_1(%arg0: i32) -> (i32, i32) {
    %c0_i32 = arith.constant 0 : i32
    %c0_i32_0 = arith.constant 0 : i32
    %c0_i32_1 = arith.constant 0 : i32
    return %c0_i32, %c0_i32_0 : i32, i32
  }
  func.func @transform_2(%arg0: i32) -> (i32, i32) {
    %c0_i32 = arith.constant 0 : i32
    %c0_i32_0 = arith.constant 0 : i32
    %c0_i32_1 = arith.constant 0 : i32
    return %c0_i32, %c0_i32_0 : i32, i32
  }
  func.func @transform_3(%arg0: i32) -> (i32, i32) {
    %c0_i32 = arith.constant 0 : i32
    %c0_i32_0 = arith.constant 0 : i32
    %c0_i32_1 = arith.constant 0 : i32
    return %c0_i32, %c0_i32_0 : i32, i32
  }
  func.func @transform_4(%arg0: i32) -> (i32, i32) {
    %c0_i32 = arith.constant 0 : i32
    %c0_i32_0 = arith.constant 0 : i32
    %c0_i32_1 = arith.constant 0 : i32
    return %c0_i32, %c0_i32_0 : i32, i32
  }
  func.func @transform_5(%arg0: i32) -> (i32, i32) {
    %c0_i32 = arith.constant 0 : i32
    %c0_i32_0 = arith.constant 0 : i32
    %c0_i32_1 = arith.constant 0 : i32
    return %c0_i32, %c0_i32_0 : i32, i32
  }
  func.func @transform_6(%arg0: i32) -> (i32, i32) {
    %c0_i32 = arith.constant 0 : i32
    %c0_i32_0 = arith.constant 0 : i32
    %c0_i32_1 = arith.constant 0 : i32
    return %c0_i32, %c0_i32_0 : i32, i32
  }
  func.func @transform_7(%arg0: i32) -> (i32, i32) {
    %c0_i32 = arith.constant 0 : i32
    %c0_i32_0 = arith.constant 0 : i32
    %c0_i32_1 = arith.constant 0 : i32
    return %c0_i32, %c0_i32_0 : i32, i32
  }
  func.func @transform_8(%arg0: i32) -> (i32, i32) {
    %c0_i32 = arith.constant 0 : i32
    %c0_i32_0 = arith.constant 0 : i32
    %c0_i32_1 = arith.constant 0 : i32
    return %c0_i32, %c0_i32_0 : i32, i32
  }
  func.func @transform_9(%arg0: i32) -> (i32, i32) {
    %c0_i32 = arith.constant 0 : i32
    %c0_i32_0 = arith.constant 0 : i32
    return %arg0, %c0_i32 : i32, i32
  }
}

</mosaic_0001>

<llo_original>
// kernel: tpu_custom_call.1
$region0: #{tpu_custom_call.1}
  #allocation0 [shape = 'u32[]', space=smem, size = 0x4, offset = 0x4, fixed_abs, tag = 'smem constant byte address 0x4 - core index']
  #allocation1 [shape = 'u32[144,128]{1,0:T(1,128)}', space=vmem, size = 0x12000, scoped, tag = 'internal scratch']
  %s0 = inlined_call_operand.hbm [shape: f32[8,32], index: 0, kind: input, shape index: {}]
  %s1 = inlined_call_operand.hbm [shape: f32[32,128], index: 1, kind: input, shape index: {}]
  %s2 = inlined_call_operand.vmem [shape: f32[1,128], index: 2, kind: input, shape index: {}]
  %s3 = inlined_call_operand.hbm [shape: f32[128,128], index: 3, kind: input, shape index: {}]
  %s4 = inlined_call_operand.vmem [shape: f32[1,128], index: 4, kind: input, shape index: {}]
  %s5 = inlined_call_operand.hbm [shape: f32[128,128], index: 5, kind: input, shape index: {}]
  %s6 = inlined_call_operand.vmem [shape: f32[1,128], index: 6, kind: input, shape index: {}]
  %s7 = inlined_call_operand.hbm [shape: f32[128,128], index: 7, kind: input, shape index: {}]
  %s8 = inlined_call_operand.vmem [shape: f32[1,128], index: 8, kind: input, shape index: {}]
  %s9 = inlined_call_operand.hbm [shape: f32[8,128], index: 9, kind: output, shape index: {}]
  %s10 = sld [smem:[#allocation0]]
  $region66: #{tpu_custom_call.1} parent=0
    _
  %s12 = ssub.s32 1, %s10
  %s13 = scalar_select 0, %s12, %s10
  $region1: #{tpu_custom_call.1} parent=0
    #allocation2 [shape = 'u8[4096]{0}', space=vmem, size = 0x1000, scoped, tag = 'input window, operand 0, single buffered']
    #allocation3 [shape = 's32[1]{0}', space=sflag, size = 0x4, scoped, tag = 'scoped memory for tpu_custom_call.1']
    #allocation4 [shape = 's32[1]{0}', space=sflag, size = 0x4, scoped, tag = 'scoped memory for tpu_custom_call.1']
    #allocation5 [shape = 'u8[16384]{0}', space=vmem, size = 0x4000, scoped, tag = 'input window, operand 1, single buffered']
    #allocation6 [shape = 's32[1]{0}', space=sflag, size = 0x4, scoped, tag = 'scoped memory for tpu_custom_call.1']
    #allocation7 [shape = 'u8[65536]{0}', space=vmem, size = 0x10000, scoped, tag = 'input window, operand 3, single buffered']
    #allocation8 [shape = 'u8[65536]{0}', space=vmem, size = 0x10000, scoped, tag = 'input window, operand 5, single buffered']
    #allocation9 [shape = 's32[1]{0}', space=sflag, size = 0x4, scoped, tag = 'scoped memory for tpu_custom_call.1']
    #allocation10 [shape = 'u8[65536]{0}', space=vmem, size = 0x10000, scoped, tag = 'input window, operand 7, single buffered']
    #allocation11 [shape = 'u8[4096]{0}', space=vmem, size = 0x1000, scoped, tag = 'output window, operand 0, single buffered']
    %14 = vsyncpa [#allocation3], 0
    %15 = vsyncpa [#allocation6], 0
    %16 = vsyncpa [#allocation9], 0
    %17 = vsyncpa [#allocation4], 0
    // Predicated region
    $region2: #{tpu_custom_call.1} parent=1 // pred_check
      _
    $region3: #{tpu_custom_call.1} parent=1 // pred_check_branch
      %19 = sbr.rel (0) target = $region5
    $region4: #{tpu_custom_call.1} parent=1 // pred_region
      %s21 = ssub.s32 128, 128
      %22 = vsyncadd [#allocation3], %s21
      %s24 = sshll.u32 [#allocation2], 4
      %s25 = int_to_ptr.vmem [resolvable:$true] %s24
      %27 = dma.hbm_to_vmem [thread:$0]  %s0, 128, %s25, [#allocation3]
    $region5: #{tpu_custom_call.1} parent=1 // pred_fallthru
      _
    // Predicated region
    $region6: #{tpu_custom_call.1} parent=1 // pred_check
      _
    $region7: #{tpu_custom_call.1} parent=1 // pred_check_branch
      %29 = sbr.rel (0) target = $region9
    $region8: #{tpu_custom_call.1} parent=1 // pred_region
      %s31 = ssub.s32 512, 512
      %32 = vsyncadd [#allocation6], %s31
      %s33 = sshll.u32 [#allocation5], 4
      %s34 = int_to_ptr.vmem [resolvable:$true] %s33
      %39 = dma.hbm_to_vmem [thread:$0]  %s1, 512, %s34, [#allocation6], 128, 128, 8
    $region9: #{tpu_custom_call.1} parent=1 // pred_fallthru
      _
    // Predicated region
    $region10: #{tpu_custom_call.1} parent=1 // pred_check
      _
    $region11: #{tpu_custom_call.1} parent=1 // pred_check_branch
      %41 = sbr.rel (0) target = $region13
    $region12: #{tpu_custom_call.1} parent=1 // pred_region
      _
    $region13: #{tpu_custom_call.1} parent=1 // pred_fallthru
      _
    // Predicated region
    $region14: #{tpu_custom_call.1} parent=1 // pred_check
      _
    $region15: #{tpu_custom_call.1} parent=1 // pred_check_branch
      %43 = sbr.rel (0) target = $region17
    $region16: #{tpu_custom_call.1} parent=1 // pred_region
      %s45 = ssub.s32 2048, 2048
      %46 = vsyncadd [#allocation6], %s45
      %s47 = sshll.u32 [#allocation7], 4
      %s48 = int_to_ptr.vmem [resolvable:$true] %s47
      %53 = dma.hbm_to_vmem [thread:$0]  %s3, 2048, %s48, [#allocation6], 128, 128, 8
    $region17: #{tpu_custom_call.1} parent=1 // pred_fallthru
      _
    // Predicated region
    $region18: #{tpu_custom_call.1} parent=1 // pred_check
      _
    $region19: #{tpu_custom_call.1} parent=1 // pred_check_branch
      %55 = sbr.rel (0) target = $region21
    $region20: #{tpu_custom_call.1} parent=1 // pred_region
      _
    $region21: #{tpu_custom_call.1} parent=1 // pred_fallthru
      _
    // Predicated region
    $region22: #{tpu_custom_call.1} parent=1 // pred_check
      _
    $region23: #{tpu_custom_call.1} parent=1 // pred_check_branch
      %57 = sbr.rel (0) target = $region25
    $region24: #{tpu_custom_call.1} parent=1 // pred_region
      %s59 = ssub.s32 2048, 2048
      %60 = vsyncadd [#allocation9], %s59
      %s61 = sshll.u32 [#allocation8], 4
      %s62 = int_to_ptr.vmem [resolvable:$true] %s61
      %67 = dma.hbm_to_vmem [thread:$0]  %s5, 2048, %s62, [#allocation9], 128, 128, 8
    $region25: #{tpu_custom_call.1} parent=1 // pred_fallthru
      _
    // Predicated region
    $region26: #{tpu_custom_call.1} parent=1 // pred_check
      _
    $region27: #{tpu_custom_call.1} parent=1 // pred_check_branch
      %69 = sbr.rel (0) target = $region29
    $region28: #{tpu_custom_call.1} parent=1 // pred_region
      _
    $region29: #{tpu_custom_call.1} parent=1 // pred_fallthru
      _
    // Predicated region
    $region30: #{tpu_custom_call.1} parent=1 // pred_check
      _
    $region31: #{tpu_custom_call.1} parent=1 // pred_check_branch
      %71 = sbr.rel (0) target = $region33
    $region32: #{tpu_custom_call.1} parent=1 // pred_region
      %s73 = ssub.s32 2048, 2048
      %74 = vsyncadd [#allocation9], %s73
      %s75 = sshll.u32 [#allocation10], 4
      %s76 = int_to_ptr.vmem [resolvable:$true] %s75
      %81 = dma.hbm_to_vmem [thread:$0]  %s7, 2048, %s76, [#allocation9], 128, 128, 8
    $region33: #{tpu_custom_call.1} parent=1 // pred_fallthru
      _
    // Predicated region
    $region34: #{tpu_custom_call.1} parent=1 // pred_check
      _
    $region35: #{tpu_custom_call.1} parent=1 // pred_check_branch
      %83 = sbr.rel (0) target = $region37
    $region36: #{tpu_custom_call.1} parent=1 // pred_region
      _
    $region37: #{tpu_custom_call.1} parent=1 // pred_fallthru
      _
    // Predicated region
    $region38: #{tpu_custom_call.1} parent=1 // pred_check
      _
    $region39: #{tpu_custom_call.1} parent=1 // pred_check_branch
      %85 = sbr.rel (0) target = $region41
    $region40: #{tpu_custom_call.1} parent=1 // pred_region
      %86 = dma.done [#allocation3], 128
    $region41: #{tpu_custom_call.1} parent=1 // pred_fallthru
      _
    // Predicated region
    $region42: #{tpu_custom_call.1} parent=1 // pred_check
      _
    $region43: #{tpu_custom_call.1} parent=1 // pred_check_branch
      %88 = sbr.rel (0) target = $region45
    $region44: #{tpu_custom_call.1} parent=1 // pred_region
      %89 = dma.done [#allocation6], 512
    $region45: #{tpu_custom_call.1} parent=1 // pred_fallthru
      _
    // Predicated region
    $region46: #{tpu_custom_call.1} parent=1 // pred_check
      _
    $region47: #{tpu_custom_call.1} parent=1 // pred_check_branch
      %91 = sbr.rel (0) target = $region49
    $region48: #{tpu_custom_call.1} parent=1 // pred_region
      %92 = dma.done [#allocation6], 2048
    $region49: #{tpu_custom_call.1} parent=1 // pred_fallthru
      _
    // Predicated region
    $region50: #{tpu_custom_call.1} parent=1 // pred_check
      _
    $region51: #{tpu_custom_call.1} parent=1 // pred_check_branch
      %94 = sbr.rel (0) target = $region53
    $region52: #{tpu_custom_call.1} parent=1 // pred_region
      %95 = dma.done [#allocation9], 2048
    $region53: #{tpu_custom_call.1} parent=1 // pred_fallthru
      _
    // Predicated region
    $region54: #{tpu_custom_call.1} parent=1 // pred_check
      _
    $region55: #{tpu_custom_call.1} parent=1 // pred_check_branch
      %97 = sbr.rel (0) target = $region57
    $region56: #{tpu_custom_call.1} parent=1 // pred_region
      %98 = dma.done [#allocation9], 2048
    $region57: #{tpu_custom_call.1} parent=1 // pred_fallthru
      _
    %v99 = vld [vmem:[#allocation2] sm:$0xff]
    %v100 = vld [vmem:[#allocation5] sm:$0xff]
    %v101 = vld [vmem:[#allocation5 + $0x8] sm:$0xff]
    %v102 = vld [vmem:[#allocation5 + $0x10] sm:$0xff]
    %v103 = vld [vmem:[#allocation5 + $0x18] sm:$0xff]
    %v104 = vld [vmem:[%s2] sm:$0x1]
    %v106 = vlaneseq
    %v107 = vshrl.u32 %v106, 7
    %v108 = vsub.s32 0, %v107
    %v109 = vrot.slane %v104, %v108
    %vm111 = vcmask 261120
    %v113 = vsel %vm111, %v99, 0
    %115 = vmatprep.subr.mxu0 0.0
    %116 = vmatpush1.msra.mxu0 0.0
    %117 = vmatprep.subr.mxu0 0.0
    %118 = vmatpush1.msra.mxu0 0.0
    %119 = vmatprep.subr.mxu0 0.0
    %120 = vmatpush1.msra.mxu0 0.0
    %121 = vmatprep.subr.mxu0 0.0
    %122 = vmatpush1.msra.mxu0 0.0
    %123 = vmatprep.subr.mxu0 0.0
    %124 = vmatpush1.msra.mxu0 0.0
    %125 = vmatprep.subr.mxu0 0.0
    %126 = vmatpush1.msra.mxu0 0.0
    %127 = vmatprep.subr.mxu0 0.0
    %128 = vmatpush1.msra.mxu0 0.0
    %129 = vmatprep.subr.mxu0 0.0
    %130 = vmatpush1.msra.mxu0 0.0
    %131 = vmatprep.subr.mxu0 0.0
    %132 = vmatpush1.msra.mxu0 0.0
    %133 = vmatprep.subr.mxu0 0.0
    %134 = vmatpush1.msra.mxu0 0.0
    %135 = vmatprep.subr.mxu0 0.0
    %136 = vmatpush1.msra.mxu0 0.0
    %137 = vmatprep.subr.mxu0 0.0
    %138 = vmatpush1.msra.mxu0 0.0
    %139 = vmatprep.subr.mxu0 0.0
    %v140 = vand.u32 %v103, 4294901760
    %141 = vmatpush1.msra.mxu0 %v140
    %142 = vmatprep.subr.mxu0 0.0
    %v143 = vand.u32 %v102, 4294901760
    %144 = vmatpush1.msra.mxu0 %v143
    %145 = vmatprep.subr.mxu0 0.0
    %v146 = vand.u32 %v101, 4294901760
    %147 = vmatpush1.msra.mxu0 %v146
    %148 = vmatprep.subr.mxu0 0.0
    %v149 = vand.u32 %v100, 4294901760
    %150 = vmatpush1.msra.mxu0 %v149
    %151 = vmatprep.subr.mxu0 0.0
    %152 = vmatpush2.msra.mxu0 0.0
    %153 = vmatprep.subr.mxu0 0.0
    %154 = vmatpush2.msra.mxu0 0.0
    %155 = vmatprep.subr.mxu0 0.0
    %156 = vmatpush2.msra.mxu0 0.0
    %157 = vmatprep.subr.mxu0 0.0
    %158 = vmatpush2.msra.mxu0 0.0
    %159 = vmatprep.subr.mxu0 0.0
    %160 = vmatpush2.msra.mxu0 0.0
    %161 = vmatprep.subr.mxu0 0.0
    %162 = vmatpush2.msra.mxu0 0.0
    %163 = vmatprep.subr.mxu0 0.0
    %164 = vmatpush2.msra.mxu0 0.0
    %165 = vmatprep.subr.mxu0 0.0
    %166 = vmatpush2.msra.mxu0 0.0
    %167 = vmatprep.subr.mxu0 0.0
    %168 = vmatpush2.msra.mxu0 0.0
    %169 = vmatprep.subr.mxu0 0.0
    %170 = vmatpush2.msra.mxu0 0.0
    %171 = vmatprep.subr.mxu0 0.0
    %172 = vmatpush2.msra.mxu0 0.0
    %173 = vmatprep.subr.mxu0 0.0
    %174 = vmatpush2.msra.mxu0 0.0
    %175 = vmatprep.subr.mxu0 0.0
    %176 = vmatpush2.msra.mxu0 0.0
    %177 = vmatprep.subr.mxu0 0.0
    %178 = vmatpush2.msra.mxu0 0.0
    %179 = vmatprep.subr.mxu0 0.0
    %180 = vmatpush2.msra.mxu0 0.0
    %181 = vmatprep.subr.mxu0 0.0
    %182 = vmatpush2.msra.mxu0 0.0
    %183 = vmatprep.mubr.f32.mxu0 0.0
    %v184 = vand.u32 %v113, 4294901760
    %v185 = vsub.f32 %v113, %v184
    %v186 = vand.u32 %v185, 4294901760
    %v187 = vsub.f32 %v185, %v186
    %v188 = vand.u32 %v187, 4294901760
    %189 = vmatmul.mubr.f32.gmra.mxu0 %v188
    %v190 = vpop.f32.mrf.mxu0
    %v191 = vadd.f32 %v109, %v190
    %v192 = vpop.f32.mrf.mxu0
    %193 = vdwg.mxu0
    %194 = vmatprep.subr.mxu0 0.0
    %195 = vmatpush1.msra.mxu0 0.0
    %196 = vmatprep.subr.mxu0 0.0
    %197 = vmatpush1.msra.mxu0 0.0
    %198 = vmatprep.subr.mxu0 0.0
    %199 = vmatpush1.msra.mxu0 0.0
    %200 = vmatprep.subr.mxu0 0.0
    %201 = vmatpush1.msra.mxu0 0.0
    %202 = vmatprep.subr.mxu0 0.0
    %203 = vmatpush1.msra.mxu0 0.0
    %204 = vmatprep.subr.mxu0 0.0
    %205 = vmatpush1.msra.mxu0 0.0
    %206 = vmatprep.subr.mxu0 0.0
    %207 = vmatpush1.msra.mxu0 0.0
    %208 = vmatprep.subr.mxu0 0.0
    %209 = vmatpush1.msra.mxu0 0.0
    %210 = vmatprep.subr.mxu0 0.0
    %211 = vmatpush1.msra.mxu0 0.0
    %212 = vmatprep.subr.mxu0 0.0
    %213 = vmatpush1.msra.mxu0 0.0
    %214 = vmatprep.subr.mxu0 0.0
    %215 = vmatpush1.msra.mxu0 0.0
    %216 = vmatprep.subr.mxu0 0.0
    %217 = vmatpush1.msra.mxu0 0.0
    %218 = vmatprep.subr.mxu0 0.0
    %v219 = vand.u32 %v103, 4294901760
    %v220 = vsub.f32 %v103, %v219
    %v221 = vand.u32 %v220, 4294901760
    %v222 = vsub.f32 %v220, %v221
    %v223 = vand.u32 %v222, 4294901760
    %224 = vmatpush1.msra.mxu0 %v223
    %225 = vmatprep.subr.mxu0 0.0
    %v226 = vand.u32 %v102, 4294901760
    %v227 = vsub.f32 %v102, %v226
    %v228 = vand.u32 %v227, 4294901760
    %v229 = vsub.f32 %v227, %v228
    %v230 = vand.u32 %v229, 4294901760
    %231 = vmatpush1.msra.mxu0 %v230
    %232 = vmatprep.subr.mxu0 0.0
    %v233 = vand.u32 %v101, 4294901760
    %v234 = vsub.f32 %v101, %v233
    %v235 = vand.u32 %v234, 4294901760
    %v236 = vsub.f32 %v234, %v235
    %v237 = vand.u32 %v236, 4294901760
    %238 = vmatpush1.msra.mxu0 %v237
    %239 = vmatprep.subr.mxu0 0.0
    %v240 = vand.u32 %v100, 4294901760
    %v241 = vsub.f32 %v100, %v240
    %v242 = vand.u32 %v241, 4294901760
    %v243 = vsub.f32 %v241, %v242
    %v244 = vand.u32 %v243, 4294901760
    %245 = vmatpush1.msra.mxu0 %v244
    %246 = vmatprep.subr.mxu0 0.0
    %247 = vmatpush2.msra.mxu0 0.0
    %248 = vmatprep.subr.mxu0 0.0
    %249 = vmatpush2.msra.mxu0 0.0
    %250 = vmatprep.subr.mxu0 0.0
    %251 = vmatpush2.msra.mxu0 0.0
    %252 = vmatprep.subr.mxu0 0.0
    %253 = vmatpush2.msra.mxu0 0.0
    %254 = vmatprep.subr.mxu0 0.0
    %255 = vmatpush2.msra.mxu0 0.0
    %256 = vmatprep.subr.mxu0 0.0
    %257 = vmatpush2.msra.mxu0 0.0
    %258 = vmatprep.subr.mxu0 0.0
    %259 = vmatpush2.msra.mxu0 0.0
    %260 = vmatprep.subr.mxu0 0.0
    %261 = vmatpush2.msra.mxu0 0.0
    %262 = vmatprep.subr.mxu0 0.0
    %263 = vmatpush2.msra.mxu0 0.0
    %264 = vmatprep.subr.mxu0 0.0
    %265 = vmatpush2.msra.mxu0 0.0
    %266 = vmatprep.subr.mxu0 0.0
    %267 = vmatpush2.msra.mxu0 0.0
    %268 = vmatprep.subr.mxu0 0.0
    %269 = vmatpush2.msra.mxu0 0.0
    %270 = vmatprep.subr.mxu0 0.0
    %271 = vmatpush2.msra.mxu0 0.0
    %272 = vmatprep.subr.mxu0 0.0
    %273 = vmatpush2.msra.mxu0 0.0
    %274 = vmatprep.subr.mxu0 0.0
    %275 = vmatpush2.msra.mxu0 0.0
    %276 = vmatprep.subr.mxu0 0.0
    %277 = vmatpush2.msra.mxu0 0.0
    %278 = vmatprep.mubr.f32.mxu0 0.0
    %v279 = vand.u32 %v113, 4294901760
    %280 = vmatmul.mubr.f32.gmra.mxu0 %v279
    %v281 = vpop.f32.mrf.mxu0
    %v282 = vadd.f32 %v191, %v281
    %v283 = vpop.f32.mrf.mxu0
    %284 = vdwg.mxu0
    %285 = vmatprep.subr.mxu0 0.0
    %286 = vmatpush1.msra.mxu0 0.0
    %287 = vmatprep.subr.mxu0 0.0
    %288 = vmatpush1.msra.mxu0 0.0
    %289 = vmatprep.subr.mxu0 0.0
    %290 = vmatpush1.msra.mxu0 0.0
    %291 = vmatprep.subr.mxu0 0.0
    %292 = vmatpush1.msra.mxu0 0.0
    %293 = vmatprep.subr.mxu0 0.0
    %294 = vmatpush1.msra.mxu0 0.0
    %295 = vmatprep.subr.mxu0 0.0
    %296 = vmatpush1.msra.mxu0 0.0
    %297 = vmatprep.subr.mxu0 0.0
    %298 = vmatpush1.msra.mxu0 0.0
    %299 = vmatprep.subr.mxu0 0.0
    %300 = vmatpush1.msra.mxu0 0.0
    %301 = vmatprep.subr.mxu0 0.0
    %302 = vmatpush1.msra.mxu0 0.0
    %303 = vmatprep.subr.mxu0 0.0
    %304 = vmatpush1.msra.mxu0 0.0
    %305 = vmatprep.subr.mxu0 0.0
    %306 = vmatpush1.msra.mxu0 0.0
    %307 = vmatprep.subr.mxu0 0.0
    %308 = vmatpush1.msra.mxu0 0.0
    %309 = vmatprep.subr.mxu0 0.0
    %v310 = vand.u32 %v103, 4294901760
    %v311 = vsub.f32 %v103, %v310
    %312 = vmatpush1.msra.mxu0 %v311
    %313 = vmatprep.subr.mxu0 0.0
    %v314 = vand.u32 %v102, 4294901760
    %v315 = vsub.f32 %v102, %v314
    %316 = vmatpush1.msra.mxu0 %v315
    %317 = vmatprep.subr.mxu0 0.0
    %v318 = vand.u32 %v101, 4294901760
    %v319 = vsub.f32 %v101, %v318
    %320 = vmatpush1.msra.mxu0 %v319
    %321 = vmatprep.subr.mxu0 0.0
    %v322 = vand.u32 %v100, 4294901760
    %v323 = vsub.f32 %v100, %v322
    %324 = vmatpush1.msra.mxu0 %v323
    %325 = vmatprep.subr.mxu0 0.0
    %326 = vmatpush2.msra.mxu0 0.0
    %327 = vmatprep.subr.mxu0 0.0
    %328 = vmatpush2.msra.mxu0 0.0
    %329 = vmatprep.subr.mxu0 0.0
    %330 = vmatpush2.msra.mxu0 0.0
    %331 = vmatprep.subr.mxu0 0.0
    %332 = vmatpush2.msra.mxu0 0.0
    %333 = vmatprep.subr.mxu0 0.0
    %334 = vmatpush2.msra.mxu0 0.0
    %335 = vmatprep.subr.mxu0 0.0
    %336 = vmatpush2.msra.mxu0 0.0
    %337 = vmatprep.subr.mxu0 0.0
    %338 = vmatpush2.msra.mxu0 0.0
    %339 = vmatprep.subr.mxu0 0.0
    %340 = vmatpush2.msra.mxu0 0.0
    %341 = vmatprep.subr.mxu0 0.0
    %342 = vmatpush2.msra.mxu0 0.0
    %343 = vmatprep.subr.mxu0 0.0
    %344 = vmatpush2.msra.mxu0 0.0
    %345 = vmatprep.subr.mxu0 0.0
    %346 = vmatpush2.msra.mxu0 0.0
    %347 = vmatprep.subr.mxu0 0.0
    %348 = vmatpush2.msra.mxu0 0.0
    %349 = vmatprep.subr.mxu0 0.0
    %350 = vmatpush2.msra.mxu0 0.0
    %351 = vmatprep.subr.mxu0 0.0
    %352 = vmatpush2.msra.mxu0 0.0
    %353 = vmatprep.subr.mxu0 0.0
    %354 = vmatpush2.msra.mxu0 0.0
    %355 = vmatprep.subr.mxu0 0.0
    %356 = vmatpush2.msra.mxu0 0.0
    %357 = vmatprep.mubr.f32.mxu0 0.0
    %v358 = vand.u32 %v113, 4294901760
    %v359 = vsub.f32 %v113, %v358
    %360 = vmatmul.mubr.f32.gmra.mxu0 %v359
    %v361 = vpop.f32.mrf.mxu0
    %v362 = vadd.f32 %v282, %v361
    %v363 = vpop.f32.mrf.mxu0
    %364 = vdwg.mxu0
    %365 = vmatprep.subr.mxu0 0.0
    %366 = vmatpush1.msra.mxu0 0.0
    %367 = vmatprep.subr.mxu0 0.0
    %368 = vmatpush1.msra.mxu0 0.0
    %369 = vmatprep.subr.mxu0 0.0
    %370 = vmatpush1.msra.mxu0 0.0
    %371 = vmatprep.subr.mxu0 0.0
    %372 = vmatpush1.msra.mxu0 0.0
    %373 = vmatprep.subr.mxu0 0.0
    %374 = vmatpush1.msra.mxu0 0.0
    %375 = vmatprep.subr.mxu0 0.0
    %376 = vmatpush1.msra.mxu0 0.0
    %377 = vmatprep.subr.mxu0 0.0
    %378 = vmatpush1.msra.mxu0 0.0
    %379 = vmatprep.subr.mxu0 0.0
    %380 = vmatpush1.msra.mxu0 0.0
    %381 = vmatprep.subr.mxu0 0.0
    %382 = vmatpush1.msra.mxu0 0.0
    %383 = vmatprep.subr.mxu0 0.0
    %384 = vmatpush1.msra.mxu0 0.0
    %385 = vmatprep.subr.mxu0 0.0
    %386 = vmatpush1.msra.mxu0 0.0
    %387 = vmatprep.subr.mxu0 0.0
    %388 = vmatpush1.msra.mxu0 0.0
    %389 = vmatprep.subr.mxu0 0.0
    %v390 = vand.u32 %v103, 4294901760
    %391 = vmatpush1.msra.mxu0 %v390
    %392 = vmatprep.subr.mxu0 0.0
    %v393 = vand.u32 %v102, 4294901760
    %394 = vmatpush1.msra.mxu0 %v393
    %395 = vmatprep.subr.mxu0 0.0
    %v396 = vand.u32 %v101, 4294901760
    %397 = vmatpush1.msra.mxu0 %v396
    %398 = vmatprep.subr.mxu0 0.0
    %v399 = vand.u32 %v100, 4294901760
    %400 = vmatpush1.msra.mxu0 %v399
    %401 = vmatprep.subr.mxu0 0.0
    %402 = vmatpush2.msra.mxu0 0.0
    %403 = vmatprep.subr.mxu0 0.0
    %404 = vmatpush2.msra.mxu0 0.0
    %405 = vmatprep.subr.mxu0 0.0
    %406 = vmatpush2.msra.mxu0 0.0
    %407 = vmatprep.subr.mxu0 0.0
    %408 = vmatpush2.msra.mxu0 0.0
    %409 = vmatprep.subr.mxu0 0.0
    %410 = vmatpush2.msra.mxu0 0.0
    %411 = vmatprep.subr.mxu0 0.0
    %412 = vmatpush2.msra.mxu0 0.0
    %413 = vmatprep.subr.mxu0 0.0
    %414 = vmatpush2.msra.mxu0 0.0
    %415 = vmatprep.subr.mxu0 0.0
    %416 = vmatpush2.msra.mxu0 0.0
    %417 = vmatprep.subr.mxu0 0.0
    %418 = vmatpush2.msra.mxu0 0.0
    %419 = vmatprep.subr.mxu0 0.0
    %420 = vmatpush2.msra.mxu0 0.0
    %421 = vmatprep.subr.mxu0 0.0
    %422 = vmatpush2.msra.mxu0 0.0
    %423 = vmatprep.subr.mxu0 0.0
    %424 = vmatpush2.msra.mxu0 0.0
    %425 = vmatprep.subr.mxu0 0.0
    %426 = vmatpush2.msra.mxu0 0.0
    %427 = vmatprep.subr.mxu0 0.0
    %428 = vmatpush2.msra.mxu0 0.0
    %429 = vmatprep.subr.mxu0 0.0
    %430 = vmatpush2.msra.mxu0 0.0
    %431 = vmatprep.subr.mxu0 0.0
    %432 = vmatpush2.msra.mxu0 0.0
    %433 = vmatprep.mubr.f32.mxu0 0.0
    %v434 = vand.u32 %v113, 4294901760
    %v435 = vsub.f32 %v113, %v434
    %v436 = vand.u32 %v435, 4294901760
    %437 = vmatmul.mubr.f32.gmra.mxu0 %v436
    %v438 = vpop.f32.mrf.mxu0
    %v439 = vadd.f32 %v362, %v438
    %v440 = vpop.f32.mrf.mxu0
    %441 = vdwg.mxu0
    %442 = vmatprep.subr.mxu0 0.0
    %443 = vmatpush1.msra.mxu0 0.0
    %444 = vmatprep.subr.mxu0 0.0
    %445 = vmatpush1.msra.mxu0 0.0
    %446 = vmatprep.subr.mxu0 0.0
    %447 = vmatpush1.msra.mxu0 0.0
    %448 = vmatprep.subr.mxu0 0.0
    %449 = vmatpush1.msra.mxu0 0.0
    %450 = vmatprep.subr.mxu0 0.0
    %451 = vmatpush1.msra.mxu0 0.0
    %452 = vmatprep.subr.mxu0 0.0
    %453 = vmatpush1.msra.mxu0 0.0
    %454 = vmatprep.subr.mxu0 0.0
    %455 = vmatpush1.msra.mxu0 0.0
    %456 = vmatprep.subr.mxu0 0.0
    %457 = vmatpush1.msra.mxu0 0.0
    %458 = vmatprep.subr.mxu0 0.0
    %459 = vmatpush1.msra.mxu0 0.0
    %460 = vmatprep.subr.mxu0 0.0
    %461 = vmatpush1.msra.mxu0 0.0
    %462 = vmatprep.subr.mxu0 0.0
    %463 = vmatpush1.msra.mxu0 0.0
    %464 = vmatprep.subr.mxu0 0.0
    %465 = vmatpush1.msra.mxu0 0.0
    %466 = vmatprep.subr.mxu0 0.0
    %v467 = vand.u32 %v103, 4294901760
    %v468 = vsub.f32 %v103, %v467
    %v469 = vand.u32 %v468, 4294901760
    %470 = vmatpush1.msra.mxu0 %v469
    %471 = vmatprep.subr.mxu0 0.0
    %v472 = vand.u32 %v102, 4294901760
    %v473 = vsub.f32 %v102, %v472
    %v474 = vand.u32 %v473, 4294901760
    %475 = vmatpush1.msra.mxu0 %v474
    %476 = vmatprep.subr.mxu0 0.0
    %v477 = vand.u32 %v101, 4294901760
    %v478 = vsub.f32 %v101, %v477
    %v479 = vand.u32 %v478, 4294901760
    %480 = vmatpush1.msra.mxu0 %v479
    %481 = vmatprep.subr.mxu0 0.0
    %v482 = vand.u32 %v100, 4294901760
    %v483 = vsub.f32 %v100, %v482
    %v484 = vand.u32 %v483, 4294901760
    %485 = vmatpush1.msra.mxu0 %v484
    %486 = vmatprep.subr.mxu0 0.0
    %487 = vmatpush2.msra.mxu0 0.0
    %488 = vmatprep.subr.mxu0 0.0
    %489 = vmatpush2.msra.mxu0 0.0
    %490 = vmatprep.subr.mxu0 0.0
    %491 = vmatpush2.msra.mxu0 0.0
    %492 = vmatprep.subr.mxu0 0.0
    %493 = vmatpush2.msra.mxu0 0.0
    %494 = vmatprep.subr.mxu0 0.0
    %495 = vmatpush2.msra.mxu0 0.0
    %496 = vmatprep.subr.mxu0 0.0
    %497 = vmatpush2.msra.mxu0 0.0
    %498 = vmatprep.subr.mxu0 0.0
    %499 = vmatpush2.msra.mxu0 0.0
    %500 = vmatprep.subr.mxu0 0.0
    %501 = vmatpush2.msra.mxu0 0.0
    %502 = vmatprep.subr.mxu0 0.0
    %503 = vmatpush2.msra.mxu0 0.0
    %504 = vmatprep.subr.mxu0 0.0
    %505 = vmatpush2.msra.mxu0 0.0
    %506 = vmatprep.subr.mxu0 0.0
    %507 = vmatpush2.msra.mxu0 0.0
    %508 = vmatprep.subr.mxu0 0.0
    %509 = vmatpush2.msra.mxu0 0.0
    %510 = vmatprep.subr.mxu0 0.0
    %511 = vmatpush2.msra.mxu0 0.0
    %512 = vmatprep.subr.mxu0 0.0
    %513 = vmatpush2.msra.mxu0 0.0
    %514 = vmatprep.subr.mxu0 0.0
    %515 = vmatpush2.msra.mxu0 0.0
    %516 = vmatprep.subr.mxu0 0.0
    %517 = vmatpush2.msra.mxu0 0.0
    %518 = vmatprep.mubr.f32.mxu0 0.0
    %v519 = vand.u32 %v113, 4294901760
    %520 = vmatmul.mubr.f32.gmra.mxu0 %v519
    %v521 = vpop.f32.mrf.mxu0
    %v522 = vadd.f32 %v439, %v521
    %v523 = vpop.f32.mrf.mxu0
    %524 = vdwg.mxu0
    %525 = vmatprep.subr.mxu0 0.0
    %526 = vmatpush1.msra.mxu0 0.0
    %527 = vmatprep.subr.mxu0 0.0
    %528 = vmatpush1.msra.mxu0 0.0
    %529 = vmatprep.subr.mxu0 0.0
    %530 = vmatpush1.msra.mxu0 0.0
    %531 = vmatprep.subr.mxu0 0.0
    %532 = vmatpush1.msra.mxu0 0.0
    %533 = vmatprep.subr.mxu0 0.0
    %534 = vmatpush1.msra.mxu0 0.0
    %535 = vmatprep.subr.mxu0 0.0
    %536 = vmatpush1.msra.mxu0 0.0
    %537 = vmatprep.subr.mxu0 0.0
    %538 = vmatpush1.msra.mxu0 0.0
    %539 = vmatprep.subr.mxu0 0.0
    %540 = vmatpush1.msra.mxu0 0.0
    %541 = vmatprep.subr.mxu0 0.0
    %542 = vmatpush1.msra.mxu0 0.0
    %543 = vmatprep.subr.mxu0 0.0
    %544 = vmatpush1.msra.mxu0 0.0
    %545 = vmatprep.subr.mxu0 0.0
    %546 = vmatpush1.msra.mxu0 0.0
    %547 = vmatprep.subr.mxu0 0.0
    %548 = vmatpush1.msra.mxu0 0.0
    %549 = vmatprep.subr.mxu0 0.0
    %v550 = vand.u32 %v103, 4294901760
    %551 = vmatpush1.msra.mxu0 %v550
    %552 = vmatprep.subr.mxu0 0.0
    %v553 = vand.u32 %v102, 4294901760
    %554 = vmatpush1.msra.mxu0 %v553
    %555 = vmatprep.subr.mxu0 0.0
    %v556 = vand.u32 %v101, 4294901760
    %557 = vmatpush1.msra.mxu0 %v556
    %558 = vmatprep.subr.mxu0 0.0
    %v559 = vand.u32 %v100, 4294901760
    %560 = vmatpush1.msra.mxu0 %v559
    %561 = vmatprep.subr.mxu0 0.0
    %562 = vmatpush2.msra.mxu0 0.0
    %563 = vmatprep.subr.mxu0 0.0
    %564 = vmatpush2.msra.mxu0 0.0
    %565 = vmatprep.subr.mxu0 0.0
    %566 = vmatpush2.msra.mxu0 0.0
    %567 = vmatprep.subr.mxu0 0.0
    %568 = vmatpush2.msra.mxu0 0.0
    %569 = vmatprep.subr.mxu0 0.0
    %570 = vmatpush2.msra.mxu0 0.0
    %571 = vmatprep.subr.mxu0 0.0
    %572 = vmatpush2.msra.mxu0 0.0
    %573 = vmatprep.subr.mxu0 0.0
    %574 = vmatpush2.msra.mxu0 0.0
    %575 = vmatprep.subr.mxu0 0.0
    %576 = vmatpush2.msra.mxu0 0.0
    %577 = vmatprep.subr.mxu0 0.0
    %578 = vmatpush2.msra.mxu0 0.0
    %579 = vmatprep.subr.mxu0 0.0
    %580 = vmatpush2.msra.mxu0 0.0
    %581 = vmatprep.subr.mxu0 0.0
    %582 = vmatpush2.msra.mxu0 0.0
    %583 = vmatprep.subr.mxu0 0.0
    %584 = vmatpush2.msra.mxu0 0.0
    %585 = vmatprep.subr.mxu0 0.0
    %586 = vmatpush2.msra.mxu0 0.0
    %587 = vmatprep.subr.mxu0 0.0
    %588 = vmatpush2.msra.mxu0 0.0
    %589 = vmatprep.subr.mxu0 0.0
    %590 = vmatpush2.msra.mxu0 0.0
    %591 = vmatprep.subr.mxu0 0.0
    %592 = vmatpush2.msra.mxu0 0.0
    %593 = vmatprep.mubr.f32.mxu0 0.0
    %v594 = vand.u32 %v113, 4294901760
    %595 = vmatmul.mubr.f32.gmra.mxu0 %v594
    %v596 = vpop.f32.mrf.mxu0
    %v597 = vadd.f32 %v522, %v596
    %v598 = vpop.f32.mrf.mxu0
    %599 = vdwg.mxu0
    %v600 = vmul.f32 %v597, 0.5
    %v601 = vmul.f32 %v597, 0.70710677
    %v602 = verf.f32.pop %v601
    %v603 = vadd.f32 %v602, 1.0
    %v604 = vmul.f32 %v600, %v603
    %v605 = vld [vmem:[#allocation7] sm:$0xff]
    %v606 = vld [vmem:[#allocation7 + $0x8] sm:$0xff]
    %v607 = vld [vmem:[#allocation7 + $0x10] sm:$0xff]
    %v608 = vld [vmem:[#allocation7 + $0x18] sm:$0xff]
    %v609 = vld [vmem:[#allocation7 + $0x20] sm:$0xff]
    %v610 = vld [vmem:[#allocation7 + $0x28] sm:$0xff]
    %v611 = vld [vmem:[#allocation7 + $0x30] sm:$0xff]
    %v612 = vld [vmem:[#allocation7 + $0x38] sm:$0xff]
    %v613 = vld [vmem:[#allocation7 + $0x40] sm:$0xff]
    %v614 = vld [vmem:[#allocation7 + $0x48] sm:$0xff]
    %v615 = vld [vmem:[#allocation7 + $0x50] sm:$0xff]
    %v616 = vld [vmem:[#allocation7 + $0x58] sm:$0xff]
    %v617 = vld [vmem:[#allocation7 + $0x60] sm:$0xff]
    %v618 = vld [vmem:[#allocation7 + $0x68] sm:$0xff]
    %v619 = vld [vmem:[#allocation7 + $0x70] sm:$0xff]
    %v620 = vld [vmem:[#allocation7 + $0x78] sm:$0xff]
    %v621 = vld [vmem:[%s4] sm:$0x1]
    %v623 = vlaneseq
    %v624 = vshrl.u32 %v623, 7
    %v625 = vsub.s32 0, %v624
    %v626 = vrot.slane %v621, %v625
    %628 = vmatprep.subr.mxu0 0.0
    %v629 = vand.u32 %v620, 4294901760
    %630 = vmatpush1.msra.mxu0 %v629
    %631 = vmatprep.subr.mxu0 0.0
    %v632 = vand.u32 %v619, 4294901760
    %633 = vmatpush1.msra.mxu0 %v632
    %634 = vmatprep.subr.mxu0 0.0
    %v635 = vand.u32 %v618, 4294901760
    %636 = vmatpush1.msra.mxu0 %v635
    %637 = vmatprep.subr.mxu0 0.0
    %v638 = vand.u32 %v617, 4294901760
    %639 = vmatpush1.msra.mxu0 %v638
    %640 = vmatprep.subr.mxu0 0.0
    %v641 = vand.u32 %v616, 4294901760
    %642 = vmatpush1.msra.mxu0 %v641
    %643 = vmatprep.subr.mxu0 0.0
    %v644 = vand.u32 %v615, 4294901760
    %645 = vmatpush1.msra.mxu0 %v644
    %646 = vmatprep.subr.mxu0 0.0
    %v647 = vand.u32 %v614, 4294901760
    %648 = vmatpush1.msra.mxu0 %v647
    %649 = vmatprep.subr.mxu0 0.0
    %v650 = vand.u32 %v613, 4294901760
    %651 = vmatpush1.msra.mxu0 %v650
    %652 = vmatprep.subr.mxu0 0.0
    %v653 = vand.u32 %v612, 4294901760
    %654 = vmatpush1.msra.mxu0 %v653
    %655 = vmatprep.subr.mxu0 0.0
    %v656 = vand.u32 %v611, 4294901760
    %657 = vmatpush1.msra.mxu0 %v656
    %658 = vmatprep.subr.mxu0 0.0
    %v659 = vand.u32 %v610, 4294901760
    %660 = vmatpush1.msra.mxu0 %v659
    %661 = vmatprep.subr.mxu0 0.0
    %v662 = vand.u32 %v609, 4294901760
    %663 = vmatpush1.msra.mxu0 %v662
    %664 = vmatprep.subr.mxu0 0.0
    %v665 = vand.u32 %v608, 4294901760
    %666 = vmatpush1.msra.mxu0 %v665
    %667 = vmatprep.subr.mxu0 0.0
    %v668 = vand.u32 %v607, 4294901760
    %669 = vmatpush1.msra.mxu0 %v668
    %670 = vmatprep.subr.mxu0 0.0
    %v671 = vand.u32 %v606, 4294901760
    %672 = vmatpush1.msra.mxu0 %v671
    %673 = vmatprep.subr.mxu0 0.0
    %v674 = vand.u32 %v605, 4294901760
    %675 = vmatpush1.msra.mxu0 %v674
    %676 = vmatprep.subr.mxu0 0.0
    %677 = vmatpush2.msra.mxu0 0.0
    %678 = vmatprep.subr.mxu0 0.0
    %679 = vmatpush2.msra.mxu0 0.0
    %680 = vmatprep.subr.mxu0 0.0
    %681 = vmatpush2.msra.mxu0 0.0
    %682 = vmatprep.subr.mxu0 0.0
    %683 = vmatpush2.msra.mxu0 0.0
    %684 = vmatprep.subr.mxu0 0.0
    %685 = vmatpush2.msra.mxu0 0.0
    %686 = vmatprep.subr.mxu0 0.0
    %687 = vmatpush2.msra.mxu0 0.0
    %688 = vmatprep.subr.mxu0 0.0
    %689 = vmatpush2.msra.mxu0 0.0
    %690 = vmatprep.subr.mxu0 0.0
    %691 = vmatpush2.msra.mxu0 0.0
    %692 = vmatprep.subr.mxu0 0.0
    %693 = vmatpush2.msra.mxu0 0.0
    %694 = vmatprep.subr.mxu0 0.0
    %695 = vmatpush2.msra.mxu0 0.0
    %696 = vmatprep.subr.mxu0 0.0
    %697 = vmatpush2.msra.mxu0 0.0
    %698 = vmatprep.subr.mxu0 0.0
    %699 = vmatpush2.msra.mxu0 0.0
    %700 = vmatprep.subr.mxu0 0.0
    %701 = vmatpush2.msra.mxu0 0.0
    %702 = vmatprep.subr.mxu0 0.0
    %703 = vmatpush2.msra.mxu0 0.0
    %704 = vmatprep.subr.mxu0 0.0
    %705 = vmatpush2.msra.mxu0 0.0
    %706 = vmatprep.subr.mxu0 0.0
    %707 = vmatpush2.msra.mxu0 0.0
    %708 = vmatprep.mubr.f32.mxu0 0.0
    %v709 = vand.u32 %v604, 4294901760
    %v710 = vsub.f32 %v604, %v709
    %v711 = vand.u32 %v710, 4294901760
    %v712 = vsub.f32 %v710, %v711
    %v713 = vand.u32 %v712, 4294901760
    %714 = vmatmul.mubr.f32.gmra.mxu0 %v713
    %v715 = vpop.f32.mrf.mxu0
    %v716 = vadd.f32 %v626, %v715
    %v717 = vpop.f32.mrf.mxu0
    %718 = vdwg.mxu0
    %719 = vmatprep.subr.mxu0 0.0
    %v720 = vand.u32 %v620, 4294901760
    %v721 = vsub.f32 %v620, %v720
    %v722 = vand.u32 %v721, 4294901760
    %v723 = vsub.f32 %v721, %v722
    %v724 = vand.u32 %v723, 4294901760
    %725 = vmatpush1.msra.mxu0 %v724
    %726 = vmatprep.subr.mxu0 0.0
    %v727 = vand.u32 %v619, 4294901760
    %v728 = vsub.f32 %v619, %v727
    %v729 = vand.u32 %v728, 4294901760
    %v730 = vsub.f32 %v728, %v729
    %v731 = vand.u32 %v730, 4294901760
    %732 = vmatpush1.msra.mxu0 %v731
    %733 = vmatprep.subr.mxu0 0.0
    %v734 = vand.u32 %v618, 4294901760
    %v735 = vsub.f32 %v618, %v734
    %v736 = vand.u32 %v735, 4294901760
    %v737 = vsub.f32 %v735, %v736
    %v738 = vand.u32 %v737, 4294901760
    %739 = vmatpush1.msra.mxu0 %v738
    %740 = vmatprep.subr.mxu0 0.0
    %v741 = vand.u32 %v617, 4294901760
    %v742 = vsub.f32 %v617, %v741
    %v743 = vand.u32 %v742, 4294901760
    %v744 = vsub.f32 %v742, %v743
    %v745 = vand.u32 %v744, 4294901760
    %746 = vmatpush1.msra.mxu0 %v745
    %747 = vmatprep.subr.mxu0 0.0
    %v748 = vand.u32 %v616, 4294901760
    %v749 = vsub.f32 %v616, %v748
    %v750 = vand.u32 %v749, 4294901760
    %v751 = vsub.f32 %v749, %v750
    %v752 = vand.u32 %v751, 4294901760
    %753 = vmatpush1.msra.mxu0 %v752
    %754 = vmatprep.subr.mxu0 0.0
    %v755 = vand.u32 %v615, 4294901760
    %v756 = vsub.f32 %v615, %v755
    %v757 = vand.u32 %v756, 4294901760
    %v758 = vsub.f32 %v756, %v757
    %v759 = vand.u32 %v758, 4294901760
    %760 = vmatpush1.msra.mxu0 %v759
    %761 = vmatprep.subr.mxu0 0.0
    %v762 = vand.u32 %v614, 4294901760
    %v763 = vsub.f32 %v614, %v762
    %v764 = vand.u32 %v763, 4294901760
    %v765 = vsub.f32 %v763, %v764
    %v766 = vand.u32 %v765, 4294901760
    %767 = vmatpush1.msra.mxu0 %v766
    %768 = vmatprep.subr.mxu0 0.0
    %v769 = vand.u32 %v613, 4294901760
    %v770 = vsub.f32 %v613, %v769
    %v771 = vand.u32 %v770, 4294901760
    %v772 = vsub.f32 %v770, %v771
    %v773 = vand.u32 %v772, 4294901760
    %774 = vmatpush1.msra.mxu0 %v773
    %775 = vmatprep.subr.mxu0 0.0
    %v776 = vand.u32 %v612, 4294901760
    %v777 = vsub.f32 %v612, %v776
    %v778 = vand.u32 %v777, 4294901760
    %v779 = vsub.f32 %v777, %v778
    %v780 = vand.u32 %v779, 4294901760
    %781 = vmatpush1.msra.mxu0 %v780
    %782 = vmatprep.subr.mxu0 0.0
    %v783 = vand.u32 %v611, 4294901760
    %v784 = vsub.f32 %v611, %v783
    %v785 = vand.u32 %v784, 4294901760
    %v786 = vsub.f32 %v784, %v785
    %v787 = vand.u32 %v786, 4294901760
    %788 = vmatpush1.msra.mxu0 %v787
    %789 = vmatprep.subr.mxu0 0.0
    %v790 = vand.u32 %v610, 4294901760
    %v791 = vsub.f32 %v610, %v790
    %v792 = vand.u32 %v791, 4294901760
    %v793 = vsub.f32 %v791, %v792
    %v794 = vand.u32 %v793, 4294901760
    %795 = vmatpush1.msra.mxu0 %v794
    %796 = vmatprep.subr.mxu0 0.0
    %v797 = vand.u32 %v609, 4294901760
    %v798 = vsub.f32 %v609, %v797
    %v799 = vand.u32 %v798, 4294901760
    %v800 = vsub.f32 %v798, %v799
    %v801 = vand.u32 %v800, 4294901760
    %802 = vmatpush1.msra.mxu0 %v801
    %803 = vmatprep.subr.mxu0 0.0
    %v804 = vand.u32 %v608, 4294901760
    %v805 = vsub.f32 %v608, %v804
    %v806 = vand.u32 %v805, 4294901760
    %v807 = vsub.f32 %v805, %v806
    %v808 = vand.u32 %v807, 4294901760
    %809 = vmatpush1.msra.mxu0 %v808
    %810 = vmatprep.subr.mxu0 0.0
    %v811 = vand.u32 %v607, 4294901760
    %v812 = vsub.f32 %v607, %v811
    %v813 = vand.u32 %v812, 4294901760
    %v814 = vsub.f32 %v812, %v813
    %v815 = vand.u32 %v814, 4294901760
    %816 = vmatpush1.msra.mxu0 %v815
    %817 = vmatprep.subr.mxu0 0.0
    %v818 = vand.u32 %v606, 4294901760
    %v819 = vsub.f32 %v606, %v818
    %v820 = vand.u32 %v819, 4294901760
    %v821 = vsub.f32 %v819, %v820
    %v822 = vand.u32 %v821, 4294901760
    %823 = vmatpush1.msra.mxu0 %v822
    %824 = vmatprep.subr.mxu0 0.0
    %v825 = vand.u32 %v605, 4294901760
    %v826 = vsub.f32 %v605, %v825
    %v827 = vand.u32 %v826, 4294901760
    %v828 = vsub.f32 %v826, %v827
    %v829 = vand.u32 %v828, 4294901760
    %830 = vmatpush1.msra.mxu0 %v829
    %831 = vmatprep.subr.mxu0 0.0
    %832 = vmatpush2.msra.mxu0 0.0
    %833 = vmatprep.subr.mxu0 0.0
    %834 = vmatpush2.msra.mxu0 0.0
    %835 = vmatprep.subr.mxu0 0.0
    %836 = vmatpush2.msra.mxu0 0.0
    %837 = vmatprep.subr.mxu0 0.0
    %838 = vmatpush2.msra.mxu0 0.0
    %839 = vmatprep.subr.mxu0 0.0
    %840 = vmatpush2.msra.mxu0 0.0
    %841 = vmatprep.subr.mxu0 0.0
    %842 = vmatpush2.msra.mxu0 0.0
    %843 = vmatprep.subr.mxu0 0.0
    %844 = vmatpush2.msra.mxu0 0.0
    %845 = vmatprep.subr.mxu0 0.0
    %846 = vmatpush2.msra.mxu0 0.0
    %847 = vmatprep.subr.mxu0 0.0
    %848 = vmatpush2.msra.mxu0 0.0
    %849 = vmatprep.subr.mxu0 0.0
    %850 = vmatpush2.msra.mxu0 0.0
    %851 = vmatprep.subr.mxu0 0.0
    %852 = vmatpush2.msra.mxu0 0.0
    %853 = vmatprep.subr.mxu0 0.0
    %854 = vmatpush2.msra.mxu0 0.0
    %855 = vmatprep.subr.mxu0 0.0
    %856 = vmatpush2.msra.mxu0 0.0
    %857 = vmatprep.subr.mxu0 0.0
    %858 = vmatpush2.msra.mxu0 0.0
    %859 = vmatprep.subr.mxu0 0.0
    %860 = vmatpush2.msra.mxu0 0.0
    %861 = vmatprep.subr.mxu0 0.0
    %862 = vmatpush2.msra.mxu0 0.0
    %863 = vmatprep.mubr.f32.mxu0 0.0
    %v864 = vand.u32 %v604, 4294901760
    %865 = vmatmul.mubr.f32.gmra.mxu0 %v864
    %v866 = vpop.f32.mrf.mxu0
    %v867 = vadd.f32 %v716, %v866
    %v868 = vpop.f32.mrf.mxu0
    %869 = vdwg.mxu0
    %870 = vmatprep.subr.mxu0 0.0
    %v871 = vand.u32 %v620, 4294901760
    %v872 = vsub.f32 %v620, %v871
    %873 = vmatpush1.msra.mxu0 %v872
    %874 = vmatprep.subr.mxu0 0.0
    %v875 = vand.u32 %v619, 4294901760
    %v876 = vsub.f32 %v619, %v875
    %877 = vmatpush1.msra.mxu0 %v876
    %878 = vmatprep.subr.mxu0 0.0
    %v879 = vand.u32 %v618, 4294901760
    %v880 = vsub.f32 %v618, %v879
    %881 = vmatpush1.msra.mxu0 %v880
    %882 = vmatprep.subr.mxu0 0.0
    %v883 = vand.u32 %v617, 4294901760
    %v884 = vsub.f32 %v617, %v883
    %885 = vmatpush1.msra.mxu0 %v884
    %886 = vmatprep.subr.mxu0 0.0
    %v887 = vand.u32 %v616, 4294901760
    %v888 = vsub.f32 %v616, %v887
    %889 = vmatpush1.msra.mxu0 %v888
    %890 = vmatprep.subr.mxu0 0.0
    %v891 = vand.u32 %v615, 4294901760
    %v892 = vsub.f32 %v615, %v891
    %893 = vmatpush1.msra.mxu0 %v892
    %894 = vmatprep.subr.mxu0 0.0
    %v895 = vand.u32 %v614, 4294901760
    %v896 = vsub.f32 %v614, %v895
    %897 = vmatpush1.msra.mxu0 %v896
    %898 = vmatprep.subr.mxu0 0.0
    %v899 = vand.u32 %v613, 4294901760
    %v900 = vsub.f32 %v613, %v899
    %901 = vmatpush1.msra.mxu0 %v900
    %902 = vmatprep.subr.mxu0 0.0
    %v903 = vand.u32 %v612, 4294901760
    %v904 = vsub.f32 %v612, %v903
    %905 = vmatpush1.msra.mxu0 %v904
    %906 = vmatprep.subr.mxu0 0.0
    %v907 = vand.u32 %v611, 4294901760
    %v908 = vsub.f32 %v611, %v907
    %909 = vmatpush1.msra.mxu0 %v908
    %910 = vmatprep.subr.mxu0 0.0
    %v911 = vand.u32 %v610, 4294901760
    %v912 = vsub.f32 %v610, %v911
    %913 = vmatpush1.msra.mxu0 %v912
    %914 = vmatprep.subr.mxu0 0.0
    %v915 = vand.u32 %v609, 4294901760
    %v916 = vsub.f32 %v609, %v915
    %917 = vmatpush1.msra.mxu0 %v916
    %918 = vmatprep.subr.mxu0 0.0
    %v919 = vand.u32 %v608, 4294901760
    %v920 = vsub.f32 %v608, %v919
    %921 = vmatpush1.msra.mxu0 %v920
    %922 = vmatprep.subr.mxu0 0.0
    %v923 = vand.u32 %v607, 4294901760
    %v924 = vsub.f32 %v607, %v923
    %925 = vmatpush1.msra.mxu0 %v924
    %926 = vmatprep.subr.mxu0 0.0
    %v927 = vand.u32 %v606, 4294901760
    %v928 = vsub.f32 %v606, %v927
    %929 = vmatpush1.msra.mxu0 %v928
    %930 = vmatprep.subr.mxu0 0.0
    %v931 = vand.u32 %v605, 4294901760
    %v932 = vsub.f32 %v605, %v931
    %933 = vmatpush1.msra.mxu0 %v932
    %934 = vmatprep.subr.mxu0 0.0
    %935 = vmatpush2.msra.mxu0 0.0
    %936 = vmatprep.subr.mxu0 0.0
    %937 = vmatpush2.msra.mxu0 0.0
    %938 = vmatprep.subr.mxu0 0.0
    %939 = vmatpush2.msra.mxu0 0.0
    %940 = vmatprep.subr.mxu0 0.0
    %941 = vmatpush2.msra.mxu0 0.0
    %942 = vmatprep.subr.mxu0 0.0
    %943 = vmatpush2.msra.mxu0 0.0
    %944 = vmatprep.subr.mxu0 0.0
    %945 = vmatpush2.msra.mxu0 0.0
    %946 = vmatprep.subr.mxu0 0.0
    %947 = vmatpush2.msra.mxu0 0.0
    %948 = vmatprep.subr.mxu0 0.0
    %949 = vmatpush2.msra.mxu0 0.0
    %950 = vmatprep.subr.mxu0 0.0
    %951 = vmatpush2.msra.mxu0 0.0
    %952 = vmatprep.subr.mxu0 0.0
    %953 = vmatpush2.msra.mxu0 0.0
    %954 = vmatprep.subr.mxu0 0.0
    %955 = vmatpush2.msra.mxu0 0.0
    %956 = vmatprep.subr.mxu0 0.0
    %957 = vmatpush2.msra.mxu0 0.0
    %958 = vmatprep.subr.mxu0 0.0
    %959 = vmatpush2.msra.mxu0 0.0
    %960 = vmatprep.subr.mxu0 0.0
    %961 = vmatpush2.msra.mxu0 0.0
    %962 = vmatprep.subr.mxu0 0.0
    %963 = vmatpush2.msra.mxu0 0.0
    %964 = vmatprep.subr.mxu0 0.0
    %965 = vmatpush2.msra.mxu0 0.0
    %966 = vmatprep.mubr.f32.mxu0 0.0
    %v967 = vand.u32 %v604, 4294901760
    %v968 = vsub.f32 %v604, %v967
    %969 = vmatmul.mubr.f32.gmra.mxu0 %v968
    %v970 = vpop.f32.mrf.mxu0
    %v971 = vadd.f32 %v867, %v970
    %v972 = vpop.f32.mrf.mxu0
    %973 = vdwg.mxu0
    %974 = vmatprep.subr.mxu0 0.0
    %v975 = vand.u32 %v620, 4294901760
    %976 = vmatpush1.msra.mxu0 %v975
    %977 = vmatprep.subr.mxu0 0.0
    %v978 = vand.u32 %v619, 4294901760
    %979 = vmatpush1.msra.mxu0 %v978
    %980 = vmatprep.subr.mxu0 0.0
    %v981 = vand.u32 %v618, 4294901760
    %982 = vmatpush1.msra.mxu0 %v981
    %983 = vmatprep.subr.mxu0 0.0
    %v984 = vand.u32 %v617, 4294901760
    %985 = vmatpush1.msra.mxu0 %v984
    %986 = vmatprep.subr.mxu0 0.0
    %v987 = vand.u32 %v616, 4294901760
    %988 = vmatpush1.msra.mxu0 %v987
    %989 = vmatprep.subr.mxu0 0.0
    %v990 = vand.u32 %v615, 4294901760
    %991 = vmatpush1.msra.mxu0 %v990
    %992 = vmatprep.subr.mxu0 0.0
    %v993 = vand.u32 %v614, 4294901760
    %994 = vmatpush1.msra.mxu0 %v993
    %995 = vmatprep.subr.mxu0 0.0
    %v996 = vand.u32 %v613, 4294901760
    %997 = vmatpush1.msra.mxu0 %v996
    %998 = vmatprep.subr.mxu0 0.0
    %v999 = vand.u32 %v612, 4294901760
    %1000 = vmatpush1.msra.mxu0 %v999
    %1001 = vmatprep.subr.mxu0 0.0
    %v1002 = vand.u32 %v611, 4294901760
    %1003 = vmatpush1.msra.mxu0 %v1002
    %1004 = vmatprep.subr.mxu0 0.0
    %v1005 = vand.u32 %v610, 4294901760
    %1006 = vmatpush1.msra.mxu0 %v1005
    %1007 = vmatprep.subr.mxu0 0.0
    %v1008 = vand.u32 %v609, 4294901760
    %1009 = vmatpush1.msra.mxu0 %v1008
    %1010 = vmatprep.subr.mxu0 0.0
    %v1011 = vand.u32 %v608, 4294901760
    %1012 = vmatpush1.msra.mxu0 %v1011
    %1013 = vmatprep.subr.mxu0 0.0
    %v1014 = vand.u32 %v607, 4294901760
    %1015 = vmatpush1.msra.mxu0 %v1014
    %1016 = vmatprep.subr.mxu0 0.0
    %v1017 = vand.u32 %v606, 4294901760
    %1018 = vmatpush1.msra.mxu0 %v1017
    %1019 = vmatprep.subr.mxu0 0.0
    %v1020 = vand.u32 %v605, 4294901760
    %1021 = vmatpush1.msra.mxu0 %v1020
    %1022 = vmatprep.subr.mxu0 0.0
    %1023 = vmatpush2.msra.mxu0 0.0
    %1024 = vmatprep.subr.mxu0 0.0
    %1025 = vmatpush2.msra.mxu0 0.0
    %1026 = vmatprep.subr.mxu0 0.0
    %1027 = vmatpush2.msra.mxu0 0.0
    %1028 = vmatprep.subr.mxu0 0.0
    %1029 = vmatpush2.msra.mxu0 0.0
    %1030 = vmatprep.subr.mxu0 0.0
    %1031 = vmatpush2.msra.mxu0 0.0
    %1032 = vmatprep.subr.mxu0 0.0
    %1033 = vmatpush2.msra.mxu0 0.0
    %1034 = vmatprep.subr.mxu0 0.0
    %1035 = vmatpush2.msra.mxu0 0.0
    %1036 = vmatprep.subr.mxu0 0.0
    %1037 = vmatpush2.msra.mxu0 0.0
    %1038 = vmatprep.subr.mxu0 0.0
    %1039 = vmatpush2.msra.mxu0 0.0
    %1040 = vmatprep.subr.mxu0 0.0
    %1041 = vmatpush2.msra.mxu0 0.0
    %1042 = vmatprep.subr.mxu0 0.0
    %1043 = vmatpush2.msra.mxu0 0.0
    %1044 = vmatprep.subr.mxu0 0.0
    %1045 = vmatpush2.msra.mxu0 0.0
    %1046 = vmatprep.subr.mxu0 0.0
    %1047 = vmatpush2.msra.mxu0 0.0
    %1048 = vmatprep.subr.mxu0 0.0
    %1049 = vmatpush2.msra.mxu0 0.0
    %1050 = vmatprep.subr.mxu0 0.0
    %1051 = vmatpush2.msra.mxu0 0.0
    %1052 = vmatprep.subr.mxu0 0.0
    %1053 = vmatpush2.msra.mxu0 0.0
    %1054 = vmatprep.mubr.f32.mxu0 0.0
    %v1055 = vand.u32 %v604, 4294901760
    %v1056 = vsub.f32 %v604, %v1055
    %v1057 = vand.u32 %v1056, 4294901760
    %1058 = vmatmul.mubr.f32.gmra.mxu0 %v1057
    %v1059 = vpop.f32.mrf.mxu0
    %v1060 = vadd.f32 %v971, %v1059
    %v1061 = vpop.f32.mrf.mxu0
    %1062 = vdwg.mxu0
    %1063 = vmatprep.subr.mxu0 0.0
    %v1064 = vand.u32 %v620, 4294901760
    %v1065 = vsub.f32 %v620, %v1064
    %v1066 = vand.u32 %v1065, 4294901760
    %1067 = vmatpush1.msra.mxu0 %v1066
    %1068 = vmatprep.subr.mxu0 0.0
    %v1069 = vand.u32 %v619, 4294901760
    %v1070 = vsub.f32 %v619, %v1069
    %v1071 = vand.u32 %v1070, 4294901760
    %1072 = vmatpush1.msra.mxu0 %v1071
    %1073 = vmatprep.subr.mxu0 0.0
    %v1074 = vand.u32 %v618, 4294901760
    %v1075 = vsub.f32 %v618, %v1074
    %v1076 = vand.u32 %v1075, 4294901760
    %1077 = vmatpush1.msra.mxu0 %v1076
    %1078 = vmatprep.subr.mxu0 0.0
    %v1079 = vand.u32 %v617, 4294901760
    %v1080 = vsub.f32 %v617, %v1079
    %v1081 = vand.u32 %v1080, 4294901760
    %1082 = vmatpush1.msra.mxu0 %v1081
    %1083 = vmatprep.subr.mxu0 0.0
    %v1084 = vand.u32 %v616, 4294901760
    %v1085 = vsub.f32 %v616, %v1084
    %v1086 = vand.u32 %v1085, 4294901760
    %1087 = vmatpush1.msra.mxu0 %v1086
    %1088 = vmatprep.subr.mxu0 0.0
    %v1089 = vand.u32 %v615, 4294901760
    %v1090 = vsub.f32 %v615, %v1089
    %v1091 = vand.u32 %v1090, 4294901760
    %1092 = vmatpush1.msra.mxu0 %v1091
    %1093 = vmatprep.subr.mxu0 0.0
    %v1094 = vand.u32 %v614, 4294901760
    %v1095 = vsub.f32 %v614, %v1094
    %v1096 = vand.u32 %v1095, 4294901760
    %1097 = vmatpush1.msra.mxu0 %v1096
    %1098 = vmatprep.subr.mxu0 0.0
    %v1099 = vand.u32 %v613, 4294901760
    %v1100 = vsub.f32 %v613, %v1099
    %v1101 = vand.u32 %v1100, 4294901760
    %1102 = vmatpush1.msra.mxu0 %v1101
    %1103 = vmatprep.subr.mxu0 0.0
    %v1104 = vand.u32 %v612, 4294901760
    %v1105 = vsub.f32 %v612, %v1104
    %v1106 = vand.u32 %v1105, 4294901760
    %1107 = vmatpush1.msra.mxu0 %v1106
    %1108 = vmatprep.subr.mxu0 0.0
    %v1109 = vand.u32 %v611, 4294901760
    %v1110 = vsub.f32 %v611, %v1109
    %v1111 = vand.u32 %v1110, 4294901760
    %1112 = vmatpush1.msra.mxu0 %v1111
    %1113 = vmatprep.subr.mxu0 0.0
    %v1114 = vand.u32 %v610, 4294901760
    %v1115 = vsub.f32 %v610, %v1114
    %v1116 = vand.u32 %v1115, 4294901760
    %1117 = vmatpush1.msra.mxu0 %v1116
    %1118 = vmatprep.subr.mxu0 0.0
    %v1119 = vand.u32 %v609, 4294901760
    %v1120 = vsub.f32 %v609, %v1119
    %v1121 = vand.u32 %v1120, 4294901760
    %1122 = vmatpush1.msra.mxu0 %v1121
    %1123 = vmatprep.subr.mxu0 0.0
    %v1124 = vand.u32 %v608, 4294901760
    %v1125 = vsub.f32 %v608, %v1124
    %v1126 = vand.u32 %v1125, 4294901760
    %1127 = vmatpush1.msra.mxu0 %v1126
    %1128 = vmatprep.subr.mxu0 0.0
    %v1129 = vand.u32 %v607, 4294901760
    %v1130 = vsub.f32 %v607, %v1129
    %v1131 = vand.u32 %v1130, 4294901760
    %1132 = vmatpush1.msra.mxu0 %v1131
    %1133 = vmatprep.subr.mxu0 0.0
    %v1134 = vand.u32 %v606, 4294901760
    %v1135 = vsub.f32 %v606, %v1134
    %v1136 = vand.u32 %v1135, 4294901760
    %1137 = vmatpush1.msra.mxu0 %v1136
    %1138 = vmatprep.subr.mxu0 0.0
    %v1139 = vand.u32 %v605, 4294901760
    %v1140 = vsub.f32 %v605, %v1139
    %v1141 = vand.u32 %v1140, 4294901760
    %1142 = vmatpush1.msra.mxu0 %v1141
    %1143 = vmatprep.subr.mxu0 0.0
    %1144 = vmatpush2.msra.mxu0 0.0
    %1145 = vmatprep.subr.mxu0 0.0
    %1146 = vmatpush2.msra.mxu0 0.0
    %1147 = vmatprep.subr.mxu0 0.0
    %1148 = vmatpush2.msra.mxu0 0.0
    %1149 = vmatprep.subr.mxu0 0.0
    %1150 = vmatpush2.msra.mxu0 0.0
    %1151 = vmatprep.subr.mxu0 0.0
    %1152 = vmatpush2.msra.mxu0 0.0
    %1153 = vmatprep.subr.mxu0 0.0
    %1154 = vmatpush2.msra.mxu0 0.0
    %1155 = vmatprep.subr.mxu0 0.0
    %1156 = vmatpush2.msra.mxu0 0.0
    %1157 = vmatprep.subr.mxu0 0.0
    %1158 = vmatpush2.msra.mxu0 0.0
    %1159 = vmatprep.subr.mxu0 0.0
    %1160 = vmatpush2.msra.mxu0 0.0
    %1161 = vmatprep.subr.mxu0 0.0
    %1162 = vmatpush2.msra.mxu0 0.0
    %1163 = vmatprep.subr.mxu0 0.0
    %1164 = vmatpush2.msra.mxu0 0.0
    %1165 = vmatprep.subr.mxu0 0.0
    %1166 = vmatpush2.msra.mxu0 0.0
    %1167 = vmatprep.subr.mxu0 0.0
    %1168 = vmatpush2.msra.mxu0 0.0
    %1169 = vmatprep.subr.mxu0 0.0
    %1170 = vmatpush2.msra.mxu0 0.0
    %1171 = vmatprep.subr.mxu0 0.0
    %1172 = vmatpush2.msra.mxu0 0.0
    %1173 = vmatprep.subr.mxu0 0.0
    %1174 = vmatpush2.msra.mxu0 0.0
    %1175 = vmatprep.mubr.f32.mxu0 0.0
    %v1176 = vand.u32 %v604, 4294901760
    %1177 = vmatmul.mubr.f32.gmra.mxu0 %v1176
    %v1178 = vpop.f32.mrf.mxu0
    %v1179 = vadd.f32 %v1060, %v1178
    %v1180 = vpop.f32.mrf.mxu0
    %1181 = vdwg.mxu0
    %1182 = vmatprep.subr.mxu0 0.0
    %v1183 = vand.u32 %v620, 4294901760
    %1184 = vmatpush1.msra.mxu0 %v1183
    %1185 = vmatprep.subr.mxu0 0.0
    %v1186 = vand.u32 %v619, 4294901760
    %1187 = vmatpush1.msra.mxu0 %v1186
    %1188 = vmatprep.subr.mxu0 0.0
    %v1189 = vand.u32 %v618, 4294901760
    %1190 = vmatpush1.msra.mxu0 %v1189
    %1191 = vmatprep.subr.mxu0 0.0
    %v1192 = vand.u32 %v617, 4294901760
    %1193 = vmatpush1.msra.mxu0 %v1192
    %1194 = vmatprep.subr.mxu0 0.0
    %v1195 = vand.u32 %v616, 4294901760
    %1196 = vmatpush1.msra.mxu0 %v1195
    %1197 = vmatprep.subr.mxu0 0.0
    %v1198 = vand.u32 %v615, 4294901760
    %1199 = vmatpush1.msra.mxu0 %v1198
    %1200 = vmatprep.subr.mxu0 0.0
    %v1201 = vand.u32 %v614, 4294901760
    %1202 = vmatpush1.msra.mxu0 %v1201
    %1203 = vmatprep.subr.mxu0 0.0
    %v1204 = vand.u32 %v613, 4294901760
    %1205 = vmatpush1.msra.mxu0 %v1204
    %1206 = vmatprep.subr.mxu0 0.0
    %v1207 = vand.u32 %v612, 4294901760
    %1208 = vmatpush1.msra.mxu0 %v1207
    %1209 = vmatprep.subr.mxu0 0.0
    %v1210 = vand.u32 %v611, 4294901760
    %1211 = vmatpush1.msra.mxu0 %v1210
    %1212 = vmatprep.subr.mxu0 0.0
    %v1213 = vand.u32 %v610, 4294901760
    %1214 = vmatpush1.msra.mxu0 %v1213
    %1215 = vmatprep.subr.mxu0 0.0
    %v1216 = vand.u32 %v609, 4294901760
    %1217 = vmatpush1.msra.mxu0 %v1216
    %1218 = vmatprep.subr.mxu0 0.0
    %v1219 = vand.u32 %v608, 4294901760
    %1220 = vmatpush1.msra.mxu0 %v1219
    %1221 = vmatprep.subr.mxu0 0.0
    %v1222 = vand.u32 %v607, 4294901760
    %1223 = vmatpush1.msra.mxu0 %v1222
    %1224 = vmatprep.subr.mxu0 0.0
    %v1225 = vand.u32 %v606, 4294901760
    %1226 = vmatpush1.msra.mxu0 %v1225
    %1227 = vmatprep.subr.mxu0 0.0
    %v1228 = vand.u32 %v605, 4294901760
    %1229 = vmatpush1.msra.mxu0 %v1228
    %1230 = vmatprep.subr.mxu0 0.0
    %1231 = vmatpush2.msra.mxu0 0.0
    %1232 = vmatprep.subr.mxu0 0.0
    %1233 = vmatpush2.msra.mxu0 0.0
    %1234 = vmatprep.subr.mxu0 0.0
    %1235 = vmatpush2.msra.mxu0 0.0
    %1236 = vmatprep.subr.mxu0 0.0
    %1237 = vmatpush2.msra.mxu0 0.0
    %1238 = vmatprep.subr.mxu0 0.0
    %1239 = vmatpush2.msra.mxu0 0.0
    %1240 = vmatprep.subr.mxu0 0.0
    %1241 = vmatpush2.msra.mxu0 0.0
    %1242 = vmatprep.subr.mxu0 0.0
    %1243 = vmatpush2.msra.mxu0 0.0
    %1244 = vmatprep.subr.mxu0 0.0
    %1245 = vmatpush2.msra.mxu0 0.0
    %1246 = vmatprep.subr.mxu0 0.0
    %1247 = vmatpush2.msra.mxu0 0.0
    %1248 = vmatprep.subr.mxu0 0.0
    %1249 = vmatpush2.msra.mxu0 0.0
    %1250 = vmatprep.subr.mxu0 0.0
    %1251 = vmatpush2.msra.mxu0 0.0
    %1252 = vmatprep.subr.mxu0 0.0
    %1253 = vmatpush2.msra.mxu0 0.0
    %1254 = vmatprep.subr.mxu0 0.0
    %1255 = vmatpush2.msra.mxu0 0.0
    %1256 = vmatprep.subr.mxu0 0.0
    %1257 = vmatpush2.msra.mxu0 0.0
    %1258 = vmatprep.subr.mxu0 0.0
    %1259 = vmatpush2.msra.mxu0 0.0
    %1260 = vmatprep.subr.mxu0 0.0
    %1261 = vmatpush2.msra.mxu0 0.0
    %1262 = vmatprep.mubr.f32.mxu0 0.0
    %v1263 = vand.u32 %v604, 4294901760
    %1264 = vmatmul.mubr.f32.gmra.mxu0 %v1263
    %v1265 = vpop.f32.mrf.mxu0
    %v1266 = vadd.f32 %v1179, %v1265
    %v1267 = vpop.f32.mrf.mxu0
    %1268 = vdwg.mxu0
    %v1269 = vmul.f32 %v1266, 0.5
    %v1270 = vmul.f32 %v1266, 0.70710677
    %v1271 = verf.f32.pop %v1270
    %v1272 = vadd.f32 %v1271, 1.0
    %v1273 = vmul.f32 %v1269, %v1272
    %v1274 = vld [vmem:[#allocation8] sm:$0xff]
    %v1275 = vld [vmem:[#allocation8 + $0x8] sm:$0xff]
    %v1276 = vld [vmem:[#allocation8 + $0x10] sm:$0xff]
    %v1277 = vld [vmem:[#allocation8 + $0x18] sm:$0xff]
    %v1278 = vld [vmem:[#allocation8 + $0x20] sm:$0xff]
    %v1279 = vld [vmem:[#allocation8 + $0x28] sm:$0xff]
    %v1280 = vld [vmem:[#allocation8 + $0x30] sm:$0xff]
    %v1281 = vld [vmem:[#allocation8 + $0x38] sm:$0xff]
    %v1282 = vld [vmem:[#allocation8 + $0x40] sm:$0xff]
    %v1283 = vld [vmem:[#allocation8 + $0x48] sm:$0xff]
    %v1284 = vld [vmem:[#allocation8 + $0x50] sm:$0xff]
    %v1285 = vld [vmem:[#allocation8 + $0x58] sm:$0xff]
    %v1286 = vld [vmem:[#allocation8 + $0x60] sm:$0xff]
    %v1287 = vld [vmem:[#allocation8 + $0x68] sm:$0xff]
    %v1288 = vld [vmem:[#allocation8 + $0x70] sm:$0xff]
    %v1289 = vld [vmem:[#allocation8 + $0x78] sm:$0xff]
    %v1290 = vld [vmem:[%s6] sm:$0x1]
    %v1292 = vlaneseq
    %v1293 = vshrl.u32 %v1292, 7
    %v1294 = vsub.s32 0, %v1293
    %v1295 = vrot.slane %v1290, %v1294
    %1297 = vmatprep.subr.mxu0 0.0
    %v1298 = vand.u32 %v1289, 4294901760
    %1299 = vmatpush1.msra.mxu0 %v1298
    %1300 = vmatprep.subr.mxu0 0.0
    %v1301 = vand.u32 %v1288, 4294901760
    %1302 = vmatpush1.msra.mxu0 %v1301
    %1303 = vmatprep.subr.mxu0 0.0
    %v1304 = vand.u32 %v1287, 4294901760
    %1305 = vmatpush1.msra.mxu0 %v1304
    %1306 = vmatprep.subr.mxu0 0.0
    %v1307 = vand.u32 %v1286, 4294901760
    %1308 = vmatpush1.msra.mxu0 %v1307
    %1309 = vmatprep.subr.mxu0 0.0
    %v1310 = vand.u32 %v1285, 4294901760
    %1311 = vmatpush1.msra.mxu0 %v1310
    %1312 = vmatprep.subr.mxu0 0.0
    %v1313 = vand.u32 %v1284, 4294901760
    %1314 = vmatpush1.msra.mxu0 %v1313
    %1315 = vmatprep.subr.mxu0 0.0
    %v1316 = vand.u32 %v1283, 4294901760
    %1317 = vmatpush1.msra.mxu0 %v1316
    %1318 = vmatprep.subr.mxu0 0.0
    %v1319 = vand.u32 %v1282, 4294901760
    %1320 = vmatpush1.msra.mxu0 %v1319
    %1321 = vmatprep.subr.mxu0 0.0
    %v1322 = vand.u32 %v1281, 4294901760
    %1323 = vmatpush1.msra.mxu0 %v1322
    %1324 = vmatprep.subr.mxu0 0.0
    %v1325 = vand.u32 %v1280, 4294901760
    %1326 = vmatpush1.msra.mxu0 %v1325
    %1327 = vmatprep.subr.mxu0 0.0
    %v1328 = vand.u32 %v1279, 4294901760
    %1329 = vmatpush1.msra.mxu0 %v1328
    %1330 = vmatprep.subr.mxu0 0.0
    %v1331 = vand.u32 %v1278, 4294901760
    %1332 = vmatpush1.msra.mxu0 %v1331
    %1333 = vmatprep.subr.mxu0 0.0
    %v1334 = vand.u32 %v1277, 4294901760
    %1335 = vmatpush1.msra.mxu0 %v1334
    %1336 = vmatprep.subr.mxu0 0.0
    %v1337 = vand.u32 %v1276, 4294901760
    %1338 = vmatpush1.msra.mxu0 %v1337
    %1339 = vmatprep.subr.mxu0 0.0
    %v1340 = vand.u32 %v1275, 4294901760
    %1341 = vmatpush1.msra.mxu0 %v1340
    %1342 = vmatprep.subr.mxu0 0.0
    %v1343 = vand.u32 %v1274, 4294901760
    %1344 = vmatpush1.msra.mxu0 %v1343
    %1345 = vmatprep.subr.mxu0 0.0
    %1346 = vmatpush2.msra.mxu0 0.0
    %1347 = vmatprep.subr.mxu0 0.0
    %1348 = vmatpush2.msra.mxu0 0.0
    %1349 = vmatprep.subr.mxu0 0.0
    %1350 = vmatpush2.msra.mxu0 0.0
    %1351 = vmatprep.subr.mxu0 0.0
    %1352 = vmatpush2.msra.mxu0 0.0
    %1353 = vmatprep.subr.mxu0 0.0
    %1354 = vmatpush2.msra.mxu0 0.0
    %1355 = vmatprep.subr.mxu0 0.0
    %1356 = vmatpush2.msra.mxu0 0.0
    %1357 = vmatprep.subr.mxu0 0.0
    %1358 = vmatpush2.msra.mxu0 0.0
    %1359 = vmatprep.subr.mxu0 0.0
    %1360 = vmatpush2.msra.mxu0 0.0
    %1361 = vmatprep.subr.mxu0 0.0
    %1362 = vmatpush2.msra.mxu0 0.0
    %1363 = vmatprep.subr.mxu0 0.0
    %1364 = vmatpush2.msra.mxu0 0.0
    %1365 = vmatprep.subr.mxu0 0.0
    %1366 = vmatpush2.msra.mxu0 0.0
    %1367 = vmatprep.subr.mxu0 0.0
    %1368 = vmatpush2.msra.mxu0 0.0
    %1369 = vmatprep.subr.mxu0 0.0
    %1370 = vmatpush2.msra.mxu0 0.0
    %1371 = vmatprep.subr.mxu0 0.0
    %1372 = vmatpush2.msra.mxu0 0.0
    %1373 = vmatprep.subr.mxu0 0.0
    %1374 = vmatpush2.msra.mxu0 0.0
    %1375 = vmatprep.subr.mxu0 0.0
    %1376 = vmatpush2.msra.mxu0 0.0
    %1377 = vmatprep.mubr.f32.mxu0 0.0
    %v1378 = vand.u32 %v1273, 4294901760
    %v1379 = vsub.f32 %v1273, %v1378
    %v1380 = vand.u32 %v1379, 4294901760
    %v1381 = vsub.f32 %v1379, %v1380
    %v1382 = vand.u32 %v1381, 4294901760
    %1383 = vmatmul.mubr.f32.gmra.mxu0 %v1382
    %v1384 = vpop.f32.mrf.mxu0
    %v1385 = vadd.f32 %v1295, %v1384
    %v1386 = vpop.f32.mrf.mxu0
    %1387 = vdwg.mxu0
    %1388 = vmatprep.subr.mxu0 0.0
    %v1389 = vand.u32 %v1289, 4294901760
    %v1390 = vsub.f32 %v1289, %v1389
    %v1391 = vand.u32 %v1390, 4294901760
    %v1392 = vsub.f32 %v1390, %v1391
    %v1393 = vand.u32 %v1392, 4294901760
    %1394 = vmatpush1.msra.mxu0 %v1393
    %1395 = vmatprep.subr.mxu0 0.0
    %v1396 = vand.u32 %v1288, 4294901760
    %v1397 = vsub.f32 %v1288, %v1396
    %v1398 = vand.u32 %v1397, 4294901760
    %v1399 = vsub.f32 %v1397, %v1398
    %v1400 = vand.u32 %v1399, 4294901760
    %1401 = vmatpush1.msra.mxu0 %v1400
    %1402 = vmatprep.subr.mxu0 0.0
    %v1403 = vand.u32 %v1287, 4294901760
    %v1404 = vsub.f32 %v1287, %v1403
    %v1405 = vand.u32 %v1404, 4294901760
    %v1406 = vsub.f32 %v1404, %v1405
    %v1407 = vand.u32 %v1406, 4294901760
    %1408 = vmatpush1.msra.mxu0 %v1407
    %1409 = vmatprep.subr.mxu0 0.0
    %v1410 = vand.u32 %v1286, 4294901760
    %v1411 = vsub.f32 %v1286, %v1410
    %v1412 = vand.u32 %v1411, 4294901760
    %v1413 = vsub.f32 %v1411, %v1412
    %v1414 = vand.u32 %v1413, 4294901760
    %1415 = vmatpush1.msra.mxu0 %v1414
    %1416 = vmatprep.subr.mxu0 0.0
    %v1417 = vand.u32 %v1285, 4294901760
    %v1418 = vsub.f32 %v1285, %v1417
    %v1419 = vand.u32 %v1418, 4294901760
    %v1420 = vsub.f32 %v1418, %v1419
    %v1421 = vand.u32 %v1420, 4294901760
    %1422 = vmatpush1.msra.mxu0 %v1421
    %1423 = vmatprep.subr.mxu0 0.0
    %v1424 = vand.u32 %v1284, 4294901760
    %v1425 = vsub.f32 %v1284, %v1424
    %v1426 = vand.u32 %v1425, 4294901760
    %v1427 = vsub.f32 %v1425, %v1426
    %v1428 = vand.u32 %v1427, 4294901760
    %1429 = vmatpush1.msra.mxu0 %v1428
    %1430 = vmatprep.subr.mxu0 0.0
    %v1431 = vand.u32 %v1283, 4294901760
    %v1432 = vsub.f32 %v1283, %v1431
    %v1433 = vand.u32 %v1432, 4294901760
    %v1434 = vsub.f32 %v1432, %v1433
    %v1435 = vand.u32 %v1434, 4294901760
    %1436 = vmatpush1.msra.mxu0 %v1435
    %1437 = vmatprep.subr.mxu0 0.0
    %v1438 = vand.u32 %v1282, 4294901760
    %v1439 = vsub.f32 %v1282, %v1438
    %v1440 = vand.u32 %v1439, 4294901760
    %v1441 = vsub.f32 %v1439, %v1440
    %v1442 = vand.u32 %v1441, 4294901760
    %1443 = vmatpush1.msra.mxu0 %v1442
    %1444 = vmatprep.subr.mxu0 0.0
    %v1445 = vand.u32 %v1281, 4294901760
    %v1446 = vsub.f32 %v1281, %v1445
    %v1447 = vand.u32 %v1446, 4294901760
    %v1448 = vsub.f32 %v1446, %v1447
    %v1449 = vand.u32 %v1448, 4294901760
    %1450 = vmatpush1.msra.mxu0 %v1449
    %1451 = vmatprep.subr.mxu0 0.0
    %v1452 = vand.u32 %v1280, 4294901760
    %v1453 = vsub.f32 %v1280, %v1452
    %v1454 = vand.u32 %v1453, 4294901760
    %v1455 = vsub.f32 %v1453, %v1454
    %v1456 = vand.u32 %v1455, 4294901760
    %1457 = vmatpush1.msra.mxu0 %v1456
    %1458 = vmatprep.subr.mxu0 0.0
    %v1459 = vand.u32 %v1279, 4294901760
    %v1460 = vsub.f32 %v1279, %v1459
    %v1461 = vand.u32 %v1460, 4294901760
    %v1462 = vsub.f32 %v1460, %v1461
    %v1463 = vand.u32 %v1462, 4294901760
    %1464 = vmatpush1.msra.mxu0 %v1463
    %1465 = vmatprep.subr.mxu0 0.0
    %v1466 = vand.u32 %v1278, 4294901760
    %v1467 = vsub.f32 %v1278, %v1466
    %v1468 = vand.u32 %v1467, 4294901760
    %v1469 = vsub.f32 %v1467, %v1468
    %v1470 = vand.u32 %v1469, 4294901760
    %1471 = vmatpush1.msra.mxu0 %v1470
    %1472 = vmatprep.subr.mxu0 0.0
    %v1473 = vand.u32 %v1277, 4294901760
    %v1474 = vsub.f32 %v1277, %v1473
    %v1475 = vand.u32 %v1474, 4294901760
    %v1476 = vsub.f32 %v1474, %v1475
    %v1477 = vand.u32 %v1476, 4294901760
    %1478 = vmatpush1.msra.mxu0 %v1477
    %1479 = vmatprep.subr.mxu0 0.0
    %v1480 = vand.u32 %v1276, 4294901760
    %v1481 = vsub.f32 %v1276, %v1480
    %v1482 = vand.u32 %v1481, 4294901760
    %v1483 = vsub.f32 %v1481, %v1482
    %v1484 = vand.u32 %v1483, 4294901760
    %1485 = vmatpush1.msra.mxu0 %v1484
    %1486 = vmatprep.subr.mxu0 0.0
    %v1487 = vand.u32 %v1275, 4294901760
    %v1488 = vsub.f32 %v1275, %v1487
    %v1489 = vand.u32 %v1488, 4294901760
    %v1490 = vsub.f32 %v1488, %v1489
    %v1491 = vand.u32 %v1490, 4294901760
    %1492 = vmatpush1.msra.mxu0 %v1491
    %1493 = vmatprep.subr.mxu0 0.0
    %v1494 = vand.u32 %v1274, 4294901760
    %v1495 = vsub.f32 %v1274, %v1494
    %v1496 = vand.u32 %v1495, 4294901760
    %v1497 = vsub.f32 %v1495, %v1496
    %v1498 = vand.u32 %v1497, 4294901760
    %1499 = vmatpush1.msra.mxu0 %v1498
    %1500 = vmatprep.subr.mxu0 0.0
    %1501 = vmatpush2.msra.mxu0 0.0
    %1502 = vmatprep.subr.mxu0 0.0
    %1503 = vmatpush2.msra.mxu0 0.0
    %1504 = vmatprep.subr.mxu0 0.0
    %1505 = vmatpush2.msra.mxu0 0.0
    %1506 = vmatprep.subr.mxu0 0.0
    %1507 = vmatpush2.msra.mxu0 0.0
    %1508 = vmatprep.subr.mxu0 0.0
    %1509 = vmatpush2.msra.mxu0 0.0
    %1510 = vmatprep.subr.mxu0 0.0
    %1511 = vmatpush2.msra.mxu0 0.0
    %1512 = vmatprep.subr.mxu0 0.0
    %1513 = vmatpush2.msra.mxu0 0.0
    %1514 = vmatprep.subr.mxu0 0.0
    %1515 = vmatpush2.msra.mxu0 0.0
    %1516 = vmatprep.subr.mxu0 0.0
    %1517 = vmatpush2.msra.mxu0 0.0
    %1518 = vmatprep.subr.mxu0 0.0
    %1519 = vmatpush2.msra.mxu0 0.0
    %1520 = vmatprep.subr.mxu0 0.0
    %1521 = vmatpush2.msra.mxu0 0.0
    %1522 = vmatprep.subr.mxu0 0.0
    %1523 = vmatpush2.msra.mxu0 0.0
    %1524 = vmatprep.subr.mxu0 0.0
    %1525 = vmatpush2.msra.mxu0 0.0
    %1526 = vmatprep.subr.mxu0 0.0
    %1527 = vmatpush2.msra.mxu0 0.0
    %1528 = vmatprep.subr.mxu0 0.0
    %1529 = vmatpush2.msra.mxu0 0.0
    %1530 = vmatprep.subr.mxu0 0.0
    %1531 = vmatpush2.msra.mxu0 0.0
    %1532 = vmatprep.mubr.f32.mxu0 0.0
    %v1533 = vand.u32 %v1273, 4294901760
    %1534 = vmatmul.mubr.f32.gmra.mxu0 %v1533
    %v1535 = vpop.f32.mrf.mxu0
    %v1536 = vadd.f32 %v1385, %v1535
    %v1537 = vpop.f32.mrf.mxu0
    %1538 = vdwg.mxu0
    %1539 = vmatprep.subr.mxu0 0.0
    %v1540 = vand.u32 %v1289, 4294901760
    %v1541 = vsub.f32 %v1289, %v1540
    %1542 = vmatpush1.msra.mxu0 %v1541
    %1543 = vmatprep.subr.mxu0 0.0
    %v1544 = vand.u32 %v1288, 4294901760
    %v1545 = vsub.f32 %v1288, %v1544
    %1546 = vmatpush1.msra.mxu0 %v1545
    %1547 = vmatprep.subr.mxu0 0.0
    %v1548 = vand.u32 %v1287, 4294901760
    %v1549 = vsub.f32 %v1287, %v1548
    %1550 = vmatpush1.msra.mxu0 %v1549
    %1551 = vmatprep.subr.mxu0 0.0
    %v1552 = vand.u32 %v1286, 4294901760
    %v1553 = vsub.f32 %v1286, %v1552
    %1554 = vmatpush1.msra.mxu0 %v1553
    %1555 = vmatprep.subr.mxu0 0.0
    %v1556 = vand.u32 %v1285, 4294901760
    %v1557 = vsub.f32 %v1285, %v1556
    %1558 = vmatpush1.msra.mxu0 %v1557
    %1559 = vmatprep.subr.mxu0 0.0
    %v1560 = vand.u32 %v1284, 4294901760
    %v1561 = vsub.f32 %v1284, %v1560
    %1562 = vmatpush1.msra.mxu0 %v1561
    %1563 = vmatprep.subr.mxu0 0.0
    %v1564 = vand.u32 %v1283, 4294901760
    %v1565 = vsub.f32 %v1283, %v1564
    %1566 = vmatpush1.msra.mxu0 %v1565
    %1567 = vmatprep.subr.mxu0 0.0
    %v1568 = vand.u32 %v1282, 4294901760
    %v1569 = vsub.f32 %v1282, %v1568
    %1570 = vmatpush1.msra.mxu0 %v1569
    %1571 = vmatprep.subr.mxu0 0.0
    %v1572 = vand.u32 %v1281, 4294901760
    %v1573 = vsub.f32 %v1281, %v1572
    %1574 = vmatpush1.msra.mxu0 %v1573
    %1575 = vmatprep.subr.mxu0 0.0
    %v1576 = vand.u32 %v1280, 4294901760
    %v1577 = vsub.f32 %v1280, %v1576
    %1578 = vmatpush1.msra.mxu0 %v1577
    %1579 = vmatprep.subr.mxu0 0.0
    %v1580 = vand.u32 %v1279, 4294901760
    %v1581 = vsub.f32 %v1279, %v1580
    %1582 = vmatpush1.msra.mxu0 %v1581
    %1583 = vmatprep.subr.mxu0 0.0
    %v1584 = vand.u32 %v1278, 4294901760
    %v1585 = vsub.f32 %v1278, %v1584
    %1586 = vmatpush1.msra.mxu0 %v1585
    %1587 = vmatprep.subr.mxu0 0.0
    %v1588 = vand.u32 %v1277, 4294901760
    %v1589 = vsub.f32 %v1277, %v1588
    %1590 = vmatpush1.msra.mxu0 %v1589
    %1591 = vmatprep.subr.mxu0 0.0
    %v1592 = vand.u32 %v1276, 4294901760
    %v1593 = vsub.f32 %v1276, %v1592
    %1594 = vmatpush1.msra.mxu0 %v1593
    %1595 = vmatprep.subr.mxu0 0.0
    %v1596 = vand.u32 %v1275, 4294901760
    %v1597 = vsub.f32 %v1275, %v1596
    %1598 = vmatpush1.msra.mxu0 %v1597
    %1599 = vmatprep.subr.mxu0 0.0
    %v1600 = vand.u32 %v1274, 4294901760
    %v1601 = vsub.f32 %v1274, %v1600
    %1602 = vmatpush1.msra.mxu0 %v1601
    %1603 = vmatprep.subr.mxu0 0.0
    %1604 = vmatpush2.msra.mxu0 0.0
    %1605 = vmatprep.subr.mxu0 0.0
    %1606 = vmatpush2.msra.mxu0 0.0
    %1607 = vmatprep.subr.mxu0 0.0
    %1608 = vmatpush2.msra.mxu0 0.0
    %1609 = vmatprep.subr.mxu0 0.0
    %1610 = vmatpush2.msra.mxu0 0.0
    %1611 = vmatprep.subr.mxu0 0.0
    %1612 = vmatpush2.msra.mxu0 0.0
    %1613 = vmatprep.subr.mxu0 0.0
    %1614 = vmatpush2.msra.mxu0 0.0
    %1615 = vmatprep.subr.mxu0 0.0
    %1616 = vmatpush2.msra.mxu0 0.0
    %1617 = vmatprep.subr.mxu0 0.0
    %1618 = vmatpush2.msra.mxu0 0.0
    %1619 = vmatprep.subr.mxu0 0.0
    %1620 = vmatpush2.msra.mxu0 0.0
    %1621 = vmatprep.subr.mxu0 0.0
    %1622 = vmatpush2.msra.mxu0 0.0
    %1623 = vmatprep.subr.mxu0 0.0
    %1624 = vmatpush2.msra.mxu0 0.0
    %1625 = vmatprep.subr.mxu0 0.0
    %1626 = vmatpush2.msra.mxu0 0.0
    %1627 = vmatprep.subr.mxu0 0.0
    %1628 = vmatpush2.msra.mxu0 0.0
    %1629 = vmatprep.subr.mxu0 0.0
    %1630 = vmatpush2.msra.mxu0 0.0
    %1631 = vmatprep.subr.mxu0 0.0
    %1632 = vmatpush2.msra.mxu0 0.0
    %1633 = vmatprep.subr.mxu0 0.0
    %1634 = vmatpush2.msra.mxu0 0.0
    %1635 = vmatprep.mubr.f32.mxu0 0.0
    %v1636 = vand.u32 %v1273, 4294901760
    %v1637 = vsub.f32 %v1273, %v1636
    %1638 = vmatmul.mubr.f32.gmra.mxu0 %v1637
    %v1639 = vpop.f32.mrf.mxu0
    %v1640 = vadd.f32 %v1536, %v1639
    %v1641 = vpop.f32.mrf.mxu0
    %1642 = vdwg.mxu0
    %1643 = vmatprep.subr.mxu0 0.0
    %v1644 = vand.u32 %v1289, 4294901760
    %1645 = vmatpush1.msra.mxu0 %v1644
    %1646 = vmatprep.subr.mxu0 0.0
    %v1647 = vand.u32 %v1288, 4294901760
    %1648 = vmatpush1.msra.mxu0 %v1647
    %1649 = vmatprep.subr.mxu0 0.0
    %v1650 = vand.u32 %v1287, 4294901760
    %1651 = vmatpush1.msra.mxu0 %v1650
    %1652 = vmatprep.subr.mxu0 0.0
    %v1653 = vand.u32 %v1286, 4294901760
    %1654 = vmatpush1.msra.mxu0 %v1653
    %1655 = vmatprep.subr.mxu0 0.0
    %v1656 = vand.u32 %v1285, 4294901760
    %1657 = vmatpush1.msra.mxu0 %v1656
    %1658 = vmatprep.subr.mxu0 0.0
    %v1659 = vand.u32 %v1284, 4294901760
    %1660 = vmatpush1.msra.mxu0 %v1659
    %1661 = vmatprep.subr.mxu0 0.0
    %v1662 = vand.u32 %v1283, 4294901760
    %1663 = vmatpush1.msra.mxu0 %v1662
    %1664 = vmatprep.subr.mxu0 0.0
    %v1665 = vand.u32 %v1282, 4294901760
    %1666 = vmatpush1.msra.mxu0 %v1665
    %1667 = vmatprep.subr.mxu0 0.0
    %v1668 = vand.u32 %v1281, 4294901760
    %1669 = vmatpush1.msra.mxu0 %v1668
    %1670 = vmatprep.subr.mxu0 0.0
    %v1671 = vand.u32 %v1280, 4294901760
    %1672 = vmatpush1.msra.mxu0 %v1671
    %1673 = vmatprep.subr.mxu0 0.0
    %v1674 = vand.u32 %v1279, 4294901760
    %1675 = vmatpush1.msra.mxu0 %v1674
    %1676 = vmatprep.subr.mxu0 0.0
    %v1677 = vand.u32 %v1278, 4294901760
    %1678 = vmatpush1.msra.mxu0 %v1677
    %1679 = vmatprep.subr.mxu0 0.0
    %v1680 = vand.u32 %v1277, 4294901760
    %1681 = vmatpush1.msra.mxu0 %v1680
    %1682 = vmatprep.subr.mxu0 0.0
    %v1683 = vand.u32 %v1276, 4294901760
    %1684 = vmatpush1.msra.mxu0 %v1683
    %1685 = vmatprep.subr.mxu0 0.0
    %v1686 = vand.u32 %v1275, 4294901760
    %1687 = vmatpush1.msra.mxu0 %v1686
    %1688 = vmatprep.subr.mxu0 0.0
    %v1689 = vand.u32 %v1274, 4294901760
    %1690 = vmatpush1.msra.mxu0 %v1689
    %1691 = vmatprep.subr.mxu0 0.0
    %1692 = vmatpush2.msra.mxu0 0.0
    %1693 = vmatprep.subr.mxu0 0.0
    %1694 = vmatpush2.msra.mxu0 0.0
    %1695 = vmatprep.subr.mxu0 0.0
    %1696 = vmatpush2.msra.mxu0 0.0
    %1697 = vmatprep.subr.mxu0 0.0
    %1698 = vmatpush2.msra.mxu0 0.0
    %1699 = vmatprep.subr.mxu0 0.0
    %1700 = vmatpush2.msra.mxu0 0.0
    %1701 = vmatprep.subr.mxu0 0.0
    %1702 = vmatpush2.msra.mxu0 0.0
    %1703 = vmatprep.subr.mxu0 0.0
    %1704 = vmatpush2.msra.mxu0 0.0
    %1705 = vmatprep.subr.mxu0 0.0
    %1706 = vmatpush2.msra.mxu0 0.0
    %1707 = vmatprep.subr.mxu0 0.0
    %1708 = vmatpush2.msra.mxu0 0.0
    %1709 = vmatprep.subr.mxu0 0.0
    %1710 = vmatpush2.msra.mxu0 0.0
    %1711 = vmatprep.subr.mxu0 0.0
    %1712 = vmatpush2.msra.mxu0 0.0
    %1713 = vmatprep.subr.mxu0 0.0
    %1714 = vmatpush2.msra.mxu0 0.0
    %1715 = vmatprep.subr.mxu0 0.0
    %1716 = vmatpush2.msra.mxu0 0.0
    %1717 = vmatprep.subr.mxu0 0.0
    %1718 = vmatpush2.msra.mxu0 0.0
    %1719 = vmatprep.subr.mxu0 0.0
    %1720 = vmatpush2.msra.mxu0 0.0
    %1721 = vmatprep.subr.mxu0 0.0
    %1722 = vmatpush2.msra.mxu0 0.0
    %1723 = vmatprep.mubr.f32.mxu0 0.0
    %v1724 = vand.u32 %v1273, 4294901760
    %v1725 = vsub.f32 %v1273, %v1724
    %v1726 = vand.u32 %v1725, 4294901760
    %1727 = vmatmul.mubr.f32.gmra.mxu0 %v1726
    %v1728 = vpop.f32.mrf.mxu0
    %v1729 = vadd.f32 %v1640, %v1728
    %v1730 = vpop.f32.mrf.mxu0
    %1731 = vdwg.mxu0
    %1732 = vmatprep.subr.mxu0 0.0
    %v1733 = vand.u32 %v1289, 4294901760
    %v1734 = vsub.f32 %v1289, %v1733
    %v1735 = vand.u32 %v1734, 4294901760
    %1736 = vmatpush1.msra.mxu0 %v1735
    %1737 = vmatprep.subr.mxu0 0.0
    %v1738 = vand.u32 %v1288, 4294901760
    %v1739 = vsub.f32 %v1288, %v1738
    %v1740 = vand.u32 %v1739, 4294901760
    %1741 = vmatpush1.msra.mxu0 %v1740
    %1742 = vmatprep.subr.mxu0 0.0
    %v1743 = vand.u32 %v1287, 4294901760
    %v1744 = vsub.f32 %v1287, %v1743
    %v1745 = vand.u32 %v1744, 4294901760
    %1746 = vmatpush1.msra.mxu0 %v1745
    %1747 = vmatprep.subr.mxu0 0.0
    %v1748 = vand.u32 %v1286, 4294901760
    %v1749 = vsub.f32 %v1286, %v1748
    %v1750 = vand.u32 %v1749, 4294901760
    %1751 = vmatpush1.msra.mxu0 %v1750
    %1752 = vmatprep.subr.mxu0 0.0
    %v1753 = vand.u32 %v1285, 4294901760
    %v1754 = vsub.f32 %v1285, %v1753
    %v1755 = vand.u32 %v1754, 4294901760
    %1756 = vmatpush1.msra.mxu0 %v1755
    %1757 = vmatprep.subr.mxu0 0.0
    %v1758 = vand.u32 %v1284, 4294901760
    %v1759 = vsub.f32 %v1284, %v1758
    %v1760 = vand.u32 %v1759, 4294901760
    %1761 = vmatpush1.msra.mxu0 %v1760
    %1762 = vmatprep.subr.mxu0 0.0
    %v1763 = vand.u32 %v1283, 4294901760
    %v1764 = vsub.f32 %v1283, %v1763
    %v1765 = vand.u32 %v1764, 4294901760
    %1766 = vmatpush1.msra.mxu0 %v1765
    %1767 = vmatprep.subr.mxu0 0.0
    %v1768 = vand.u32 %v1282, 4294901760
    %v1769 = vsub.f32 %v1282, %v1768
    %v1770 = vand.u32 %v1769, 4294901760
    %1771 = vmatpush1.msra.mxu0 %v1770
    %1772 = vmatprep.subr.mxu0 0.0
    %v1773 = vand.u32 %v1281, 4294901760
    %v1774 = vsub.f32 %v1281, %v1773
    %v1775 = vand.u32 %v1774, 4294901760
    %1776 = vmatpush1.msra.mxu0 %v1775
    %1777 = vmatprep.subr.mxu0 0.0
    %v1778 = vand.u32 %v1280, 4294901760
    %v1779 = vsub.f32 %v1280, %v1778
    %v1780 = vand.u32 %v1779, 4294901760
    %1781 = vmatpush1.msra.mxu0 %v1780
    %1782 = vmatprep.subr.mxu0 0.0
    %v1783 = vand.u32 %v1279, 4294901760
    %v1784 = vsub.f32 %v1279, %v1783
    %v1785 = vand.u32 %v1784, 4294901760
    %1786 = vmatpush1.msra.mxu0 %v1785
    %1787 = vmatprep.subr.mxu0 0.0
    %v1788 = vand.u32 %v1278, 4294901760
    %v1789 = vsub.f32 %v1278, %v1788
    %v1790 = vand.u32 %v1789, 4294901760
    %1791 = vmatpush1.msra.mxu0 %v1790
    %1792 = vmatprep.subr.mxu0 0.0
    %v1793 = vand.u32 %v1277, 4294901760
    %v1794 = vsub.f32 %v1277, %v1793
    %v1795 = vand.u32 %v1794, 4294901760
    %1796 = vmatpush1.msra.mxu0 %v1795
    %1797 = vmatprep.subr.mxu0 0.0
    %v1798 = vand.u32 %v1276, 4294901760
    %v1799 = vsub.f32 %v1276, %v1798
    %v1800 = vand.u32 %v1799, 4294901760
    %1801 = vmatpush1.msra.mxu0 %v1800
    %1802 = vmatprep.subr.mxu0 0.0
    %v1803 = vand.u32 %v1275, 4294901760
    %v1804 = vsub.f32 %v1275, %v1803
    %v1805 = vand.u32 %v1804, 4294901760
    %1806 = vmatpush1.msra.mxu0 %v1805
    %1807 = vmatprep.subr.mxu0 0.0
    %v1808 = vand.u32 %v1274, 4294901760
    %v1809 = vsub.f32 %v1274, %v1808
    %v1810 = vand.u32 %v1809, 4294901760
    %1811 = vmatpush1.msra.mxu0 %v1810
    %1812 = vmatprep.subr.mxu0 0.0
    %1813 = vmatpush2.msra.mxu0 0.0
    %1814 = vmatprep.subr.mxu0 0.0
    %1815 = vmatpush2.msra.mxu0 0.0
    %1816 = vmatprep.subr.mxu0 0.0
    %1817 = vmatpush2.msra.mxu0 0.0
    %1818 = vmatprep.subr.mxu0 0.0
    %1819 = vmatpush2.msra.mxu0 0.0
    %1820 = vmatprep.subr.mxu0 0.0
    %1821 = vmatpush2.msra.mxu0 0.0
    %1822 = vmatprep.subr.mxu0 0.0
    %1823 = vmatpush2.msra.mxu0 0.0
    %1824 = vmatprep.subr.mxu0 0.0
    %1825 = vmatpush2.msra.mxu0 0.0
    %1826 = vmatprep.subr.mxu0 0.0
    %1827 = vmatpush2.msra.mxu0 0.0
    %1828 = vmatprep.subr.mxu0 0.0
    %1829 = vmatpush2.msra.mxu0 0.0
    %1830 = vmatprep.subr.mxu0 0.0
    %1831 = vmatpush2.msra.mxu0 0.0
    %1832 = vmatprep.subr.mxu0 0.0
    %1833 = vmatpush2.msra.mxu0 0.0
    %1834 = vmatprep.subr.mxu0 0.0
    %1835 = vmatpush2.msra.mxu0 0.0
    %1836 = vmatprep.subr.mxu0 0.0
    %1837 = vmatpush2.msra.mxu0 0.0
    %1838 = vmatprep.subr.mxu0 0.0
    %1839 = vmatpush2.msra.mxu0 0.0
    %1840 = vmatprep.subr.mxu0 0.0
    %1841 = vmatpush2.msra.mxu0 0.0
    %1842 = vmatprep.subr.mxu0 0.0
    %1843 = vmatpush2.msra.mxu0 0.0
    %1844 = vmatprep.mubr.f32.mxu0 0.0
    %v1845 = vand.u32 %v1273, 4294901760
    %1846 = vmatmul.mubr.f32.gmra.mxu0 %v1845
    %v1847 = vpop.f32.mrf.mxu0
    %v1848 = vadd.f32 %v1729, %v1847
    %v1849 = vpop.f32.mrf.mxu0
    %1850 = vdwg.mxu0
    %1851 = vmatprep.subr.mxu0 0.0
    %v1852 = vand.u32 %v1289, 4294901760
    %1853 = vmatpush1.msra.mxu0 %v1852
    %1854 = vmatprep.subr.mxu0 0.0
    %v1855 = vand.u32 %v1288, 4294901760
    %1856 = vmatpush1.msra.mxu0 %v1855
    %1857 = vmatprep.subr.mxu0 0.0
    %v1858 = vand.u32 %v1287, 4294901760
    %1859 = vmatpush1.msra.mxu0 %v1858
    %1860 = vmatprep.subr.mxu0 0.0
    %v1861 = vand.u32 %v1286, 4294901760
    %1862 = vmatpush1.msra.mxu0 %v1861
    %1863 = vmatprep.subr.mxu0 0.0
    %v1864 = vand.u32 %v1285, 4294901760
    %1865 = vmatpush1.msra.mxu0 %v1864
    %1866 = vmatprep.subr.mxu0 0.0
    %v1867 = vand.u32 %v1284, 4294901760
    %1868 = vmatpush1.msra.mxu0 %v1867
    %1869 = vmatprep.subr.mxu0 0.0
    %v1870 = vand.u32 %v1283, 4294901760
    %1871 = vmatpush1.msra.mxu0 %v1870
    %1872 = vmatprep.subr.mxu0 0.0
    %v1873 = vand.u32 %v1282, 4294901760
    %1874 = vmatpush1.msra.mxu0 %v1873
    %1875 = vmatprep.subr.mxu0 0.0
    %v1876 = vand.u32 %v1281, 4294901760
    %1877 = vmatpush1.msra.mxu0 %v1876
    %1878 = vmatprep.subr.mxu0 0.0
    %v1879 = vand.u32 %v1280, 4294901760
    %1880 = vmatpush1.msra.mxu0 %v1879
    %1881 = vmatprep.subr.mxu0 0.0
    %v1882 = vand.u32 %v1279, 4294901760
    %1883 = vmatpush1.msra.mxu0 %v1882
    %1884 = vmatprep.subr.mxu0 0.0
    %v1885 = vand.u32 %v1278, 4294901760
    %1886 = vmatpush1.msra.mxu0 %v1885
    %1887 = vmatprep.subr.mxu0 0.0
    %v1888 = vand.u32 %v1277, 4294901760
    %1889 = vmatpush1.msra.mxu0 %v1888
    %1890 = vmatprep.subr.mxu0 0.0
    %v1891 = vand.u32 %v1276, 4294901760
    %1892 = vmatpush1.msra.mxu0 %v1891
    %1893 = vmatprep.subr.mxu0 0.0
    %v1894 = vand.u32 %v1275, 4294901760
    %1895 = vmatpush1.msra.mxu0 %v1894
    %1896 = vmatprep.subr.mxu0 0.0
    %v1897 = vand.u32 %v1274, 4294901760
    %1898 = vmatpush1.msra.mxu0 %v1897
    %1899 = vmatprep.subr.mxu0 0.0
    %1900 = vmatpush2.msra.mxu0 0.0
    %1901 = vmatprep.subr.mxu0 0.0
    %1902 = vmatpush2.msra.mxu0 0.0
    %1903 = vmatprep.subr.mxu0 0.0
    %1904 = vmatpush2.msra.mxu0 0.0
    %1905 = vmatprep.subr.mxu0 0.0
    %1906 = vmatpush2.msra.mxu0 0.0
    %1907 = vmatprep.subr.mxu0 0.0
    %1908 = vmatpush2.msra.mxu0 0.0
    %1909 = vmatprep.subr.mxu0 0.0
    %1910 = vmatpush2.msra.mxu0 0.0
    %1911 = vmatprep.subr.mxu0 0.0
    %1912 = vmatpush2.msra.mxu0 0.0
    %1913 = vmatprep.subr.mxu0 0.0
    %1914 = vmatpush2.msra.mxu0 0.0
    %1915 = vmatprep.subr.mxu0 0.0
    %1916 = vmatpush2.msra.mxu0 0.0
    %1917 = vmatprep.subr.mxu0 0.0
    %1918 = vmatpush2.msra.mxu0 0.0
    %1919 = vmatprep.subr.mxu0 0.0
    %1920 = vmatpush2.msra.mxu0 0.0
    %1921 = vmatprep.subr.mxu0 0.0
    %1922 = vmatpush2.msra.mxu0 0.0
    %1923 = vmatprep.subr.mxu0 0.0
    %1924 = vmatpush2.msra.mxu0 0.0
    %1925 = vmatprep.subr.mxu0 0.0
    %1926 = vmatpush2.msra.mxu0 0.0
    %1927 = vmatprep.subr.mxu0 0.0
    %1928 = vmatpush2.msra.mxu0 0.0
    %1929 = vmatprep.subr.mxu0 0.0
    %1930 = vmatpush2.msra.mxu0 0.0
    %1931 = vmatprep.mubr.f32.mxu0 0.0
    %v1932 = vand.u32 %v1273, 4294901760
    %1933 = vmatmul.mubr.f32.gmra.mxu0 %v1932
    %v1934 = vpop.f32.mrf.mxu0
    %v1935 = vadd.f32 %v1848, %v1934
    %v1936 = vpop.f32.mrf.mxu0
    %1937 = vdwg.mxu0
    %v1938 = vmul.f32 %v1935, 0.5
    %v1939 = vmul.f32 %v1935, 0.70710677
    %v1940 = verf.f32.pop %v1939
    %v1941 = vadd.f32 %v1940, 1.0
    %v1942 = vmul.f32 %v1938, %v1941
    %v1943 = vld [vmem:[#allocation10] sm:$0xff]
    %v1944 = vld [vmem:[#allocation10 + $0x8] sm:$0xff]
    %v1945 = vld [vmem:[#allocation10 + $0x10] sm:$0xff]
    %v1946 = vld [vmem:[#allocation10 + $0x18] sm:$0xff]
    %v1947 = vld [vmem:[#allocation10 + $0x20] sm:$0xff]
    %v1948 = vld [vmem:[#allocation10 + $0x28] sm:$0xff]
    %v1949 = vld [vmem:[#allocation10 + $0x30] sm:$0xff]
    %v1950 = vld [vmem:[#allocation10 + $0x38] sm:$0xff]
    %v1951 = vld [vmem:[#allocation10 + $0x40] sm:$0xff]
    %v1952 = vld [vmem:[#allocation10 + $0x48] sm:$0xff]
    %v1953 = vld [vmem:[#allocation10 + $0x50] sm:$0xff]
    %v1954 = vld [vmem:[#allocation10 + $0x58] sm:$0xff]
    %v1955 = vld [vmem:[#allocation10 + $0x60] sm:$0xff]
    %v1956 = vld [vmem:[#allocation10 + $0x68] sm:$0xff]
    %v1957 = vld [vmem:[#allocation10 + $0x70] sm:$0xff]
    %v1958 = vld [vmem:[#allocation10 + $0x78] sm:$0xff]
    %v1959 = vld [vmem:[%s8] sm:$0x1]
    %v1961 = vlaneseq
    %v1962 = vshrl.u32 %v1961, 7
    %v1963 = vsub.s32 0, %v1962
    %v1964 = vrot.slane %v1959, %v1963
    %1966 = vmatprep.subr.mxu0 0.0
    %v1967 = vand.u32 %v1958, 4294901760
    %1968 = vmatpush1.msra.mxu0 %v1967
    %1969 = vmatprep.subr.mxu0 0.0
    %v1970 = vand.u32 %v1957, 4294901760
    %1971 = vmatpush1.msra.mxu0 %v1970
    %1972 = vmatprep.subr.mxu0 0.0
    %v1973 = vand.u32 %v1956, 4294901760
    %1974 = vmatpush1.msra.mxu0 %v1973
    %1975 = vmatprep.subr.mxu0 0.0
    %v1976 = vand.u32 %v1955, 4294901760
    %1977 = vmatpush1.msra.mxu0 %v1976
    %1978 = vmatprep.subr.mxu0 0.0
    %v1979 = vand.u32 %v1954, 4294901760
    %1980 = vmatpush1.msra.mxu0 %v1979
    %1981 = vmatprep.subr.mxu0 0.0
    %v1982 = vand.u32 %v1953, 4294901760
    %1983 = vmatpush1.msra.mxu0 %v1982
    %1984 = vmatprep.subr.mxu0 0.0
    %v1985 = vand.u32 %v1952, 4294901760
    %1986 = vmatpush1.msra.mxu0 %v1985
    %1987 = vmatprep.subr.mxu0 0.0
    %v1988 = vand.u32 %v1951, 4294901760
    %1989 = vmatpush1.msra.mxu0 %v1988
    %1990 = vmatprep.subr.mxu0 0.0
    %v1991 = vand.u32 %v1950, 4294901760
    %1992 = vmatpush1.msra.mxu0 %v1991
    %1993 = vmatprep.subr.mxu0 0.0
    %v1994 = vand.u32 %v1949, 4294901760
    %1995 = vmatpush1.msra.mxu0 %v1994
    %1996 = vmatprep.subr.mxu0 0.0
    %v1997 = vand.u32 %v1948, 4294901760
    %1998 = vmatpush1.msra.mxu0 %v1997
    %1999 = vmatprep.subr.mxu0 0.0
    %v2000 = vand.u32 %v1947, 4294901760
    %2001 = vmatpush1.msra.mxu0 %v2000
    %2002 = vmatprep.subr.mxu0 0.0
    %v2003 = vand.u32 %v1946, 4294901760
    %2004 = vmatpush1.msra.mxu0 %v2003
    %2005 = vmatprep.subr.mxu0 0.0
    %v2006 = vand.u32 %v1945, 4294901760
    %2007 = vmatpush1.msra.mxu0 %v2006
    %2008 = vmatprep.subr.mxu0 0.0
    %v2009 = vand.u32 %v1944, 4294901760
    %2010 = vmatpush1.msra.mxu0 %v2009
    %2011 = vmatprep.subr.mxu0 0.0
    %v2012 = vand.u32 %v1943, 4294901760
    %2013 = vmatpush1.msra.mxu0 %v2012
    %2014 = vmatprep.subr.mxu0 0.0
    %2015 = vmatpush2.msra.mxu0 0.0
    %2016 = vmatprep.subr.mxu0 0.0
    %2017 = vmatpush2.msra.mxu0 0.0
    %2018 = vmatprep.subr.mxu0 0.0
    %2019 = vmatpush2.msra.mxu0 0.0
    %2020 = vmatprep.subr.mxu0 0.0
    %2021 = vmatpush2.msra.mxu0 0.0
    %2022 = vmatprep.subr.mxu0 0.0
    %2023 = vmatpush2.msra.mxu0 0.0
    %2024 = vmatprep.subr.mxu0 0.0
    %2025 = vmatpush2.msra.mxu0 0.0
    %2026 = vmatprep.subr.mxu0 0.0
    %2027 = vmatpush2.msra.mxu0 0.0
    %2028 = vmatprep.subr.mxu0 0.0
    %2029 = vmatpush2.msra.mxu0 0.0
    %2030 = vmatprep.subr.mxu0 0.0
    %2031 = vmatpush2.msra.mxu0 0.0
    %2032 = vmatprep.subr.mxu0 0.0
    %2033 = vmatpush2.msra.mxu0 0.0
    %2034 = vmatprep.subr.mxu0 0.0
    %2035 = vmatpush2.msra.mxu0 0.0
    %2036 = vmatprep.subr.mxu0 0.0
    %2037 = vmatpush2.msra.mxu0 0.0
    %2038 = vmatprep.subr.mxu0 0.0
    %2039 = vmatpush2.msra.mxu0 0.0
    %2040 = vmatprep.subr.mxu0 0.0
    %2041 = vmatpush2.msra.mxu0 0.0
    %2042 = vmatprep.subr.mxu0 0.0
    %2043 = vmatpush2.msra.mxu0 0.0
    %2044 = vmatprep.subr.mxu0 0.0
    %2045 = vmatpush2.msra.mxu0 0.0
    %2046 = vmatprep.mubr.f32.mxu0 0.0
    %v2047 = vand.u32 %v1942, 4294901760
    %v2048 = vsub.f32 %v1942, %v2047
    %v2049 = vand.u32 %v2048, 4294901760
    %v2050 = vsub.f32 %v2048, %v2049
    %v2051 = vand.u32 %v2050, 4294901760
    %2052 = vmatmul.mubr.f32.gmra.mxu0 %v2051
    %v2053 = vpop.f32.mrf.mxu0
    %v2054 = vadd.f32 %v1964, %v2053
    %v2055 = vpop.f32.mrf.mxu0
    %2056 = vdwg.mxu0
    %2057 = vmatprep.subr.mxu0 0.0
    %v2058 = vand.u32 %v1958, 4294901760
    %v2059 = vsub.f32 %v1958, %v2058
    %v2060 = vand.u32 %v2059, 4294901760
    %v2061 = vsub.f32 %v2059, %v2060
    %v2062 = vand.u32 %v2061, 4294901760
    %2063 = vmatpush1.msra.mxu0 %v2062
    %2064 = vmatprep.subr.mxu0 0.0
    %v2065 = vand.u32 %v1957, 4294901760
    %v2066 = vsub.f32 %v1957, %v2065
    %v2067 = vand.u32 %v2066, 4294901760
    %v2068 = vsub.f32 %v2066, %v2067
    %v2069 = vand.u32 %v2068, 4294901760
    %2070 = vmatpush1.msra.mxu0 %v2069
    %2071 = vmatprep.subr.mxu0 0.0
    %v2072 = vand.u32 %v1956, 4294901760
    %v2073 = vsub.f32 %v1956, %v2072
    %v2074 = vand.u32 %v2073, 4294901760
    %v2075 = vsub.f32 %v2073, %v2074
    %v2076 = vand.u32 %v2075, 4294901760
    %2077 = vmatpush1.msra.mxu0 %v2076
    %2078 = vmatprep.subr.mxu0 0.0
    %v2079 = vand.u32 %v1955, 4294901760
    %v2080 = vsub.f32 %v1955, %v2079
    %v2081 = vand.u32 %v2080, 4294901760
    %v2082 = vsub.f32 %v2080, %v2081
    %v2083 = vand.u32 %v2082, 4294901760
    %2084 = vmatpush1.msra.mxu0 %v2083
    %2085 = vmatprep.subr.mxu0 0.0
    %v2086 = vand.u32 %v1954, 4294901760
    %v2087 = vsub.f32 %v1954, %v2086
    %v2088 = vand.u32 %v2087, 4294901760
    %v2089 = vsub.f32 %v2087, %v2088
    %v2090 = vand.u32 %v2089, 4294901760
    %2091 = vmatpush1.msra.mxu0 %v2090
    %2092 = vmatprep.subr.mxu0 0.0
    %v2093 = vand.u32 %v1953, 4294901760
    %v2094 = vsub.f32 %v1953, %v2093
    %v2095 = vand.u32 %v2094, 4294901760
    %v2096 = vsub.f32 %v2094, %v2095
    %v2097 = vand.u32 %v2096, 4294901760
    %2098 = vmatpush1.msra.mxu0 %v2097
    %2099 = vmatprep.subr.mxu0 0.0
    %v2100 = vand.u32 %v1952, 4294901760
    %v2101 = vsub.f32 %v1952, %v2100
    %v2102 = vand.u32 %v2101, 4294901760
    %v2103 = vsub.f32 %v2101, %v2102
    %v2104 = vand.u32 %v2103, 4294901760
    %2105 = vmatpush1.msra.mxu0 %v2104
    %2106 = vmatprep.subr.mxu0 0.0
    %v2107 = vand.u32 %v1951, 4294901760
    %v2108 = vsub.f32 %v1951, %v2107
    %v2109 = vand.u32 %v2108, 4294901760
    %v2110 = vsub.f32 %v2108, %v2109
    %v2111 = vand.u32 %v2110, 4294901760
    %2112 = vmatpush1.msra.mxu0 %v2111
    %2113 = vmatprep.subr.mxu0 0.0
    %v2114 = vand.u32 %v1950, 4294901760
    %v2115 = vsub.f32 %v1950, %v2114
    %v2116 = vand.u32 %v2115, 4294901760
    %v2117 = vsub.f32 %v2115, %v2116
    %v2118 = vand.u32 %v2117, 4294901760
    %2119 = vmatpush1.msra.mxu0 %v2118
    %2120 = vmatprep.subr.mxu0 0.0
    %v2121 = vand.u32 %v1949, 4294901760
    %v2122 = vsub.f32 %v1949, %v2121
    %v2123 = vand.u32 %v2122, 4294901760
    %v2124 = vsub.f32 %v2122, %v2123
    %v2125 = vand.u32 %v2124, 4294901760
    %2126 = vmatpush1.msra.mxu0 %v2125
    %2127 = vmatprep.subr.mxu0 0.0
    %v2128 = vand.u32 %v1948, 4294901760
    %v2129 = vsub.f32 %v1948, %v2128
    %v2130 = vand.u32 %v2129, 4294901760
    %v2131 = vsub.f32 %v2129, %v2130
    %v2132 = vand.u32 %v2131, 4294901760
    %2133 = vmatpush1.msra.mxu0 %v2132
    %2134 = vmatprep.subr.mxu0 0.0
    %v2135 = vand.u32 %v1947, 4294901760
    %v2136 = vsub.f32 %v1947, %v2135
    %v2137 = vand.u32 %v2136, 4294901760
    %v2138 = vsub.f32 %v2136, %v2137
    %v2139 = vand.u32 %v2138, 4294901760
    %2140 = vmatpush1.msra.mxu0 %v2139
    %2141 = vmatprep.subr.mxu0 0.0
    %v2142 = vand.u32 %v1946, 4294901760
    %v2143 = vsub.f32 %v1946, %v2142
    %v2144 = vand.u32 %v2143, 4294901760
    %v2145 = vsub.f32 %v2143, %v2144
    %v2146 = vand.u32 %v2145, 4294901760
    %2147 = vmatpush1.msra.mxu0 %v2146
    %2148 = vmatprep.subr.mxu0 0.0
    %v2149 = vand.u32 %v1945, 4294901760
    %v2150 = vsub.f32 %v1945, %v2149
    %v2151 = vand.u32 %v2150, 4294901760
    %v2152 = vsub.f32 %v2150, %v2151
    %v2153 = vand.u32 %v2152, 4294901760
    %2154 = vmatpush1.msra.mxu0 %v2153
    %2155 = vmatprep.subr.mxu0 0.0
    %v2156 = vand.u32 %v1944, 4294901760
    %v2157 = vsub.f32 %v1944, %v2156
    %v2158 = vand.u32 %v2157, 4294901760
    %v2159 = vsub.f32 %v2157, %v2158
    %v2160 = vand.u32 %v2159, 4294901760
    %2161 = vmatpush1.msra.mxu0 %v2160
    %2162 = vmatprep.subr.mxu0 0.0
    %v2163 = vand.u32 %v1943, 4294901760
    %v2164 = vsub.f32 %v1943, %v2163
    %v2165 = vand.u32 %v2164, 4294901760
    %v2166 = vsub.f32 %v2164, %v2165
    %v2167 = vand.u32 %v2166, 4294901760
    %2168 = vmatpush1.msra.mxu0 %v2167
    %2169 = vmatprep.subr.mxu0 0.0
    %2170 = vmatpush2.msra.mxu0 0.0
    %2171 = vmatprep.subr.mxu0 0.0
    %2172 = vmatpush2.msra.mxu0 0.0
    %2173 = vmatprep.subr.mxu0 0.0
    %2174 = vmatpush2.msra.mxu0 0.0
    %2175 = vmatprep.subr.mxu0 0.0
    %2176 = vmatpush2.msra.mxu0 0.0
    %2177 = vmatprep.subr.mxu0 0.0
    %2178 = vmatpush2.msra.mxu0 0.0
    %2179 = vmatprep.subr.mxu0 0.0
    %2180 = vmatpush2.msra.mxu0 0.0
    %2181 = vmatprep.subr.mxu0 0.0
    %2182 = vmatpush2.msra.mxu0 0.0
    %2183 = vmatprep.subr.mxu0 0.0
    %2184 = vmatpush2.msra.mxu0 0.0
    %2185 = vmatprep.subr.mxu0 0.0
    %2186 = vmatpush2.msra.mxu0 0.0
    %2187 = vmatprep.subr.mxu0 0.0
    %2188 = vmatpush2.msra.mxu0 0.0
    %2189 = vmatprep.subr.mxu0 0.0
    %2190 = vmatpush2.msra.mxu0 0.0
    %2191 = vmatprep.subr.mxu0 0.0
    %2192 = vmatpush2.msra.mxu0 0.0
    %2193 = vmatprep.subr.mxu0 0.0
    %2194 = vmatpush2.msra.mxu0 0.0
    %2195 = vmatprep.subr.mxu0 0.0
    %2196 = vmatpush2.msra.mxu0 0.0
    %2197 = vmatprep.subr.mxu0 0.0
    %2198 = vmatpush2.msra.mxu0 0.0
    %2199 = vmatprep.subr.mxu0 0.0
    %2200 = vmatpush2.msra.mxu0 0.0
    %2201 = vmatprep.mubr.f32.mxu0 0.0
    %v2202 = vand.u32 %v1942, 4294901760
    %2203 = vmatmul.mubr.f32.gmra.mxu0 %v2202
    %v2204 = vpop.f32.mrf.mxu0
    %v2205 = vadd.f32 %v2054, %v2204
    %v2206 = vpop.f32.mrf.mxu0
    %2207 = vdwg.mxu0
    %2208 = vmatprep.subr.mxu0 0.0
    %v2209 = vand.u32 %v1958, 4294901760
    %v2210 = vsub.f32 %v1958, %v2209
    %2211 = vmatpush1.msra.mxu0 %v2210
    %2212 = vmatprep.subr.mxu0 0.0
    %v2213 = vand.u32 %v1957, 4294901760
    %v2214 = vsub.f32 %v1957, %v2213
    %2215 = vmatpush1.msra.mxu0 %v2214
    %2216 = vmatprep.subr.mxu0 0.0
    %v2217 = vand.u32 %v1956, 4294901760
    %v2218 = vsub.f32 %v1956, %v2217
    %2219 = vmatpush1.msra.mxu0 %v2218
    %2220 = vmatprep.subr.mxu0 0.0
    %v2221 = vand.u32 %v1955, 4294901760
    %v2222 = vsub.f32 %v1955, %v2221
    %2223 = vmatpush1.msra.mxu0 %v2222
    %2224 = vmatprep.subr.mxu0 0.0
    %v2225 = vand.u32 %v1954, 4294901760
    %v2226 = vsub.f32 %v1954, %v2225
    %2227 = vmatpush1.msra.mxu0 %v2226
    %2228 = vmatprep.subr.mxu0 0.0
    %v2229 = vand.u32 %v1953, 4294901760
    %v2230 = vsub.f32 %v1953, %v2229
    %2231 = vmatpush1.msra.mxu0 %v2230
    %2232 = vmatprep.subr.mxu0 0.0
    %v2233 = vand.u32 %v1952, 4294901760
    %v2234 = vsub.f32 %v1952, %v2233
    %2235 = vmatpush1.msra.mxu0 %v2234
    %2236 = vmatprep.subr.mxu0 0.0
    %v2237 = vand.u32 %v1951, 4294901760
    %v2238 = vsub.f32 %v1951, %v2237
    %2239 = vmatpush1.msra.mxu0 %v2238
    %2240 = vmatprep.subr.mxu0 0.0
    %v2241 = vand.u32 %v1950, 4294901760
    %v2242 = vsub.f32 %v1950, %v2241
    %2243 = vmatpush1.msra.mxu0 %v2242
    %2244 = vmatprep.subr.mxu0 0.0
    %v2245 = vand.u32 %v1949, 4294901760
    %v2246 = vsub.f32 %v1949, %v2245
    %2247 = vmatpush1.msra.mxu0 %v2246
    %2248 = vmatprep.subr.mxu0 0.0
    %v2249 = vand.u32 %v1948, 4294901760
    %v2250 = vsub.f32 %v1948, %v2249
    %2251 = vmatpush1.msra.mxu0 %v2250
    %2252 = vmatprep.subr.mxu0 0.0
    %v2253 = vand.u32 %v1947, 4294901760
    %v2254 = vsub.f32 %v1947, %v2253
    %2255 = vmatpush1.msra.mxu0 %v2254
    %2256 = vmatprep.subr.mxu0 0.0
    %v2257 = vand.u32 %v1946, 4294901760
    %v2258 = vsub.f32 %v1946, %v2257
    %2259 = vmatpush1.msra.mxu0 %v2258
    %2260 = vmatprep.subr.mxu0 0.0
    %v2261 = vand.u32 %v1945, 4294901760
    %v2262 = vsub.f32 %v1945, %v2261
    %2263 = vmatpush1.msra.mxu0 %v2262
    %2264 = vmatprep.subr.mxu0 0.0
    %v2265 = vand.u32 %v1944, 4294901760
    %v2266 = vsub.f32 %v1944, %v2265
    %2267 = vmatpush1.msra.mxu0 %v2266
    %2268 = vmatprep.subr.mxu0 0.0
    %v2269 = vand.u32 %v1943, 4294901760
    %v2270 = vsub.f32 %v1943, %v2269
    %2271 = vmatpush1.msra.mxu0 %v2270
    %2272 = vmatprep.subr.mxu0 0.0
    %2273 = vmatpush2.msra.mxu0 0.0
    %2274 = vmatprep.subr.mxu0 0.0
    %2275 = vmatpush2.msra.mxu0 0.0
    %2276 = vmatprep.subr.mxu0 0.0
    %2277 = vmatpush2.msra.mxu0 0.0
    %2278 = vmatprep.subr.mxu0 0.0
    %2279 = vmatpush2.msra.mxu0 0.0
    %2280 = vmatprep.subr.mxu0 0.0
    %2281 = vmatpush2.msra.mxu0 0.0
    %2282 = vmatprep.subr.mxu0 0.0
    %2283 = vmatpush2.msra.mxu0 0.0
    %2284 = vmatprep.subr.mxu0 0.0
    %2285 = vmatpush2.msra.mxu0 0.0
    %2286 = vmatprep.subr.mxu0 0.0
    %2287 = vmatpush2.msra.mxu0 0.0
    %2288 = vmatprep.subr.mxu0 0.0
    %2289 = vmatpush2.msra.mxu0 0.0
    %2290 = vmatprep.subr.mxu0 0.0
    %2291 = vmatpush2.msra.mxu0 0.0
    %2292 = vmatprep.subr.mxu0 0.0
    %2293 = vmatpush2.msra.mxu0 0.0
    %2294 = vmatprep.subr.mxu0 0.0
    %2295 = vmatpush2.msra.mxu0 0.0
    %2296 = vmatprep.subr.mxu0 0.0
    %2297 = vmatpush2.msra.mxu0 0.0
    %2298 = vmatprep.subr.mxu0 0.0
    %2299 = vmatpush2.msra.mxu0 0.0
    %2300 = vmatprep.subr.mxu0 0.0
    %2301 = vmatpush2.msra.mxu0 0.0
    %2302 = vmatprep.subr.mxu0 0.0
    %2303 = vmatpush2.msra.mxu0 0.0
    %2304 = vmatprep.mubr.f32.mxu0 0.0
    %v2305 = vand.u32 %v1942, 4294901760
    %v2306 = vsub.f32 %v1942, %v2305
    %2307 = vmatmul.mubr.f32.gmra.mxu0 %v2306
    %v2308 = vpop.f32.mrf.mxu0
    %v2309 = vadd.f32 %v2205, %v2308
    %v2310 = vpop.f32.mrf.mxu0
    %2311 = vdwg.mxu0
    %2312 = vmatprep.subr.mxu0 0.0
    %v2313 = vand.u32 %v1958, 4294901760
    %2314 = vmatpush1.msra.mxu0 %v2313
    %2315 = vmatprep.subr.mxu0 0.0
    %v2316 = vand.u32 %v1957, 4294901760
    %2317 = vmatpush1.msra.mxu0 %v2316
    %2318 = vmatprep.subr.mxu0 0.0
    %v2319 = vand.u32 %v1956, 4294901760
    %2320 = vmatpush1.msra.mxu0 %v2319
    %2321 = vmatprep.subr.mxu0 0.0
    %v2322 = vand.u32 %v1955, 4294901760
    %2323 = vmatpush1.msra.mxu0 %v2322
    %2324 = vmatprep.subr.mxu0 0.0
    %v2325 = vand.u32 %v1954, 4294901760
    %2326 = vmatpush1.msra.mxu0 %v2325
    %2327 = vmatprep.subr.mxu0 0.0
    %v2328 = vand.u32 %v1953, 4294901760
    %2329 = vmatpush1.msra.mxu0 %v2328
    %2330 = vmatprep.subr.mxu0 0.0
    %v2331 = vand.u32 %v1952, 4294901760
    %2332 = vmatpush1.msra.mxu0 %v2331
    %2333 = vmatprep.subr.mxu0 0.0
    %v2334 = vand.u32 %v1951, 4294901760
    %2335 = vmatpush1.msra.mxu0 %v2334
    %2336 = vmatprep.subr.mxu0 0.0
    %v2337 = vand.u32 %v1950, 4294901760
    %2338 = vmatpush1.msra.mxu0 %v2337
    %2339 = vmatprep.subr.mxu0 0.0
    %v2340 = vand.u32 %v1949, 4294901760
    %2341 = vmatpush1.msra.mxu0 %v2340
    %2342 = vmatprep.subr.mxu0 0.0
    %v2343 = vand.u32 %v1948, 4294901760
    %2344 = vmatpush1.msra.mxu0 %v2343
    %2345 = vmatprep.subr.mxu0 0.0
    %v2346 = vand.u32 %v1947, 4294901760
    %2347 = vmatpush1.msra.mxu0 %v2346
    %2348 = vmatprep.subr.mxu0 0.0
    %v2349 = vand.u32 %v1946, 4294901760
    %2350 = vmatpush1.msra.mxu0 %v2349
    %2351 = vmatprep.subr.mxu0 0.0
    %v2352 = vand.u32 %v1945, 4294901760
    %2353 = vmatpush1.msra.mxu0 %v2352
    %2354 = vmatprep.subr.mxu0 0.0
    %v2355 = vand.u32 %v1944, 4294901760
    %2356 = vmatpush1.msra.mxu0 %v2355
    %2357 = vmatprep.subr.mxu0 0.0
    %v2358 = vand.u32 %v1943, 4294901760
    %2359 = vmatpush1.msra.mxu0 %v2358
    %2360 = vmatprep.subr.mxu0 0.0
    %2361 = vmatpush2.msra.mxu0 0.0
    %2362 = vmatprep.subr.mxu0 0.0
    %2363 = vmatpush2.msra.mxu0 0.0
    %2364 = vmatprep.subr.mxu0 0.0
    %2365 = vmatpush2.msra.mxu0 0.0
    %2366 = vmatprep.subr.mxu0 0.0
    %2367 = vmatpush2.msra.mxu0 0.0
    %2368 = vmatprep.subr.mxu0 0.0
    %2369 = vmatpush2.msra.mxu0 0.0
    %2370 = vmatprep.subr.mxu0 0.0
    %2371 = vmatpush2.msra.mxu0 0.0
    %2372 = vmatprep.subr.mxu0 0.0
    %2373 = vmatpush2.msra.mxu0 0.0
    %2374 = vmatprep.subr.mxu0 0.0
    %2375 = vmatpush2.msra.mxu0 0.0
    %2376 = vmatprep.subr.mxu0 0.0
    %2377 = vmatpush2.msra.mxu0 0.0
    %2378 = vmatprep.subr.mxu0 0.0
    %2379 = vmatpush2.msra.mxu0 0.0
    %2380 = vmatprep.subr.mxu0 0.0
    %2381 = vmatpush2.msra.mxu0 0.0
    %2382 = vmatprep.subr.mxu0 0.0
    %2383 = vmatpush2.msra.mxu0 0.0
    %2384 = vmatprep.subr.mxu0 0.0
    %2385 = vmatpush2.msra.mxu0 0.0
    %2386 = vmatprep.subr.mxu0 0.0
    %2387 = vmatpush2.msra.mxu0 0.0
    %2388 = vmatprep.subr.mxu0 0.0
    %2389 = vmatpush2.msra.mxu0 0.0
    %2390 = vmatprep.subr.mxu0 0.0
    %2391 = vmatpush2.msra.mxu0 0.0
    %2392 = vmatprep.mubr.f32.mxu0 0.0
    %v2393 = vand.u32 %v1942, 4294901760
    %v2394 = vsub.f32 %v1942, %v2393
    %v2395 = vand.u32 %v2394, 4294901760
    %2396 = vmatmul.mubr.f32.gmra.mxu0 %v2395
    %v2397 = vpop.f32.mrf.mxu0
    %v2398 = vadd.f32 %v2309, %v2397
    %v2399 = vpop.f32.mrf.mxu0
    %2400 = vdwg.mxu0
    %2401 = vmatprep.subr.mxu0 0.0
    %v2402 = vand.u32 %v1958, 4294901760
    %v2403 = vsub.f32 %v1958, %v2402
    %v2404 = vand.u32 %v2403, 4294901760
    %2405 = vmatpush1.msra.mxu0 %v2404
    %2406 = vmatprep.subr.mxu0 0.0
    %v2407 = vand.u32 %v1957, 4294901760
    %v2408 = vsub.f32 %v1957, %v2407
    %v2409 = vand.u32 %v2408, 4294901760
    %2410 = vmatpush1.msra.mxu0 %v2409
    %2411 = vmatprep.subr.mxu0 0.0
    %v2412 = vand.u32 %v1956, 4294901760
    %v2413 = vsub.f32 %v1956, %v2412
    %v2414 = vand.u32 %v2413, 4294901760
    %2415 = vmatpush1.msra.mxu0 %v2414
    %2416 = vmatprep.subr.mxu0 0.0
    %v2417 = vand.u32 %v1955, 4294901760
    %v2418 = vsub.f32 %v1955, %v2417
    %v2419 = vand.u32 %v2418, 4294901760
    %2420 = vmatpush1.msra.mxu0 %v2419
    %2421 = vmatprep.subr.mxu0 0.0
    %v2422 = vand.u32 %v1954, 4294901760
    %v2423 = vsub.f32 %v1954, %v2422
    %v2424 = vand.u32 %v2423, 4294901760
    %2425 = vmatpush1.msra.mxu0 %v2424
    %2426 = vmatprep.subr.mxu0 0.0
    %v2427 = vand.u32 %v1953, 4294901760
    %v2428 = vsub.f32 %v1953, %v2427
    %v2429 = vand.u32 %v2428, 4294901760
    %2430 = vmatpush1.msra.mxu0 %v2429
    %2431 = vmatprep.subr.mxu0 0.0
    %v2432 = vand.u32 %v1952, 4294901760
    %v2433 = vsub.f32 %v1952, %v2432
    %v2434 = vand.u32 %v2433, 4294901760
    %2435 = vmatpush1.msra.mxu0 %v2434
    %2436 = vmatprep.subr.mxu0 0.0
    %v2437 = vand.u32 %v1951, 4294901760
    %v2438 = vsub.f32 %v1951, %v2437
    %v2439 = vand.u32 %v2438, 4294901760
    %2440 = vmatpush1.msra.mxu0 %v2439
    %2441 = vmatprep.subr.mxu0 0.0
    %v2442 = vand.u32 %v1950, 4294901760
    %v2443 = vsub.f32 %v1950, %v2442
    %v2444 = vand.u32 %v2443, 4294901760
    %2445 = vmatpush1.msra.mxu0 %v2444
    %2446 = vmatprep.subr.mxu0 0.0
    %v2447 = vand.u32 %v1949, 4294901760
    %v2448 = vsub.f32 %v1949, %v2447
    %v2449 = vand.u32 %v2448, 4294901760
    %2450 = vmatpush1.msra.mxu0 %v2449
    %2451 = vmatprep.subr.mxu0 0.0
    %v2452 = vand.u32 %v1948, 4294901760
    %v2453 = vsub.f32 %v1948, %v2452
    %v2454 = vand.u32 %v2453, 4294901760
    %2455 = vmatpush1.msra.mxu0 %v2454
    %2456 = vmatprep.subr.mxu0 0.0
    %v2457 = vand.u32 %v1947, 4294901760
    %v2458 = vsub.f32 %v1947, %v2457
    %v2459 = vand.u32 %v2458, 4294901760
    %2460 = vmatpush1.msra.mxu0 %v2459
    %2461 = vmatprep.subr.mxu0 0.0
    %v2462 = vand.u32 %v1946, 4294901760
    %v2463 = vsub.f32 %v1946, %v2462
    %v2464 = vand.u32 %v2463, 4294901760
    %2465 = vmatpush1.msra.mxu0 %v2464
    %2466 = vmatprep.subr.mxu0 0.0
    %v2467 = vand.u32 %v1945, 4294901760
    %v2468 = vsub.f32 %v1945, %v2467
    %v2469 = vand.u32 %v2468, 4294901760
    %2470 = vmatpush1.msra.mxu0 %v2469
    %2471 = vmatprep.subr.mxu0 0.0
    %v2472 = vand.u32 %v1944, 4294901760
    %v2473 = vsub.f32 %v1944, %v2472
    %v2474 = vand.u32 %v2473, 4294901760
    %2475 = vmatpush1.msra.mxu0 %v2474
    %2476 = vmatprep.subr.mxu0 0.0
    %v2477 = vand.u32 %v1943, 4294901760
    %v2478 = vsub.f32 %v1943, %v2477
    %v2479 = vand.u32 %v2478, 4294901760
    %2480 = vmatpush1.msra.mxu0 %v2479
    %2481 = vmatprep.subr.mxu0 0.0
    %2482 = vmatpush2.msra.mxu0 0.0
    %2483 = vmatprep.subr.mxu0 0.0
    %2484 = vmatpush2.msra.mxu0 0.0
    %2485 = vmatprep.subr.mxu0 0.0
    %2486 = vmatpush2.msra.mxu0 0.0
    %2487 = vmatprep.subr.mxu0 0.0
    %2488 = vmatpush2.msra.mxu0 0.0
    %2489 = vmatprep.subr.mxu0 0.0
    %2490 = vmatpush2.msra.mxu0 0.0
    %2491 = vmatprep.subr.mxu0 0.0
    %2492 = vmatpush2.msra.mxu0 0.0
    %2493 = vmatprep.subr.mxu0 0.0
    %2494 = vmatpush2.msra.mxu0 0.0
    %2495 = vmatprep.subr.mxu0 0.0
    %2496 = vmatpush2.msra.mxu0 0.0
    %2497 = vmatprep.subr.mxu0 0.0
    %2498 = vmatpush2.msra.mxu0 0.0
    %2499 = vmatprep.subr.mxu0 0.0
    %2500 = vmatpush2.msra.mxu0 0.0
    %2501 = vmatprep.subr.mxu0 0.0
    %2502 = vmatpush2.msra.mxu0 0.0
    %2503 = vmatprep.subr.mxu0 0.0
    %2504 = vmatpush2.msra.mxu0 0.0
    %2505 = vmatprep.subr.mxu0 0.0
    %2506 = vmatpush2.msra.mxu0 0.0
    %2507 = vmatprep.subr.mxu0 0.0
    %2508 = vmatpush2.msra.mxu0 0.0
    %2509 = vmatprep.subr.mxu0 0.0
    %2510 = vmatpush2.msra.mxu0 0.0
    %2511 = vmatprep.subr.mxu0 0.0
    %2512 = vmatpush2.msra.mxu0 0.0
    %2513 = vmatprep.mubr.f32.mxu0 0.0
    %v2514 = vand.u32 %v1942, 4294901760
    %2515 = vmatmul.mubr.f32.gmra.mxu0 %v2514
    %v2516 = vpop.f32.mrf.mxu0
    %v2517 = vadd.f32 %v2398, %v2516
    %v2518 = vpop.f32.mrf.mxu0
    %2519 = vdwg.mxu0
    %2520 = vmatprep.subr.mxu0 0.0
    %v2521 = vand.u32 %v1958, 4294901760
    %2522 = vmatpush1.msra.mxu0 %v2521
    %2523 = vmatprep.subr.mxu0 0.0
    %v2524 = vand.u32 %v1957, 4294901760
    %2525 = vmatpush1.msra.mxu0 %v2524
    %2526 = vmatprep.subr.mxu0 0.0
    %v2527 = vand.u32 %v1956, 4294901760
    %2528 = vmatpush1.msra.mxu0 %v2527
    %2529 = vmatprep.subr.mxu0 0.0
    %v2530 = vand.u32 %v1955, 4294901760
    %2531 = vmatpush1.msra.mxu0 %v2530
    %2532 = vmatprep.subr.mxu0 0.0
    %v2533 = vand.u32 %v1954, 4294901760
    %2534 = vmatpush1.msra.mxu0 %v2533
    %2535 = vmatprep.subr.mxu0 0.0
    %v2536 = vand.u32 %v1953, 4294901760
    %2537 = vmatpush1.msra.mxu0 %v2536
    %2538 = vmatprep.subr.mxu0 0.0
    %v2539 = vand.u32 %v1952, 4294901760
    %2540 = vmatpush1.msra.mxu0 %v2539
    %2541 = vmatprep.subr.mxu0 0.0
    %v2542 = vand.u32 %v1951, 4294901760
    %2543 = vmatpush1.msra.mxu0 %v2542
    %2544 = vmatprep.subr.mxu0 0.0
    %v2545 = vand.u32 %v1950, 4294901760
    %2546 = vmatpush1.msra.mxu0 %v2545
    %2547 = vmatprep.subr.mxu0 0.0
    %v2548 = vand.u32 %v1949, 4294901760
    %2549 = vmatpush1.msra.mxu0 %v2548
    %2550 = vmatprep.subr.mxu0 0.0
    %v2551 = vand.u32 %v1948, 4294901760
    %2552 = vmatpush1.msra.mxu0 %v2551
    %2553 = vmatprep.subr.mxu0 0.0
    %v2554 = vand.u32 %v1947, 4294901760
    %2555 = vmatpush1.msra.mxu0 %v2554
    %2556 = vmatprep.subr.mxu0 0.0
    %v2557 = vand.u32 %v1946, 4294901760
    %2558 = vmatpush1.msra.mxu0 %v2557
    %2559 = vmatprep.subr.mxu0 0.0
    %v2560 = vand.u32 %v1945, 4294901760
    %2561 = vmatpush1.msra.mxu0 %v2560
    %2562 = vmatprep.subr.mxu0 0.0
    %v2563 = vand.u32 %v1944, 4294901760
    %2564 = vmatpush1.msra.mxu0 %v2563
    %2565 = vmatprep.subr.mxu0 0.0
    %v2566 = vand.u32 %v1943, 4294901760
    %2567 = vmatpush1.msra.mxu0 %v2566
    %2568 = vmatprep.subr.mxu0 0.0
    %2569 = vmatpush2.msra.mxu0 0.0
    %2570 = vmatprep.subr.mxu0 0.0
    %2571 = vmatpush2.msra.mxu0 0.0
    %2572 = vmatprep.subr.mxu0 0.0
    %2573 = vmatpush2.msra.mxu0 0.0
    %2574 = vmatprep.subr.mxu0 0.0
    %2575 = vmatpush2.msra.mxu0 0.0
    %2576 = vmatprep.subr.mxu0 0.0
    %2577 = vmatpush2.msra.mxu0 0.0
    %2578 = vmatprep.subr.mxu0 0.0
    %2579 = vmatpush2.msra.mxu0 0.0
    %2580 = vmatprep.subr.mxu0 0.0
    %2581 = vmatpush2.msra.mxu0 0.0
    %2582 = vmatprep.subr.mxu0 0.0
    %2583 = vmatpush2.msra.mxu0 0.0
    %2584 = vmatprep.subr.mxu0 0.0
    %2585 = vmatpush2.msra.mxu0 0.0
    %2586 = vmatprep.subr.mxu0 0.0
    %2587 = vmatpush2.msra.mxu0 0.0
    %2588 = vmatprep.subr.mxu0 0.0
    %2589 = vmatpush2.msra.mxu0 0.0
    %2590 = vmatprep.subr.mxu0 0.0
    %2591 = vmatpush2.msra.mxu0 0.0
    %2592 = vmatprep.subr.mxu0 0.0
    %2593 = vmatpush2.msra.mxu0 0.0
    %2594 = vmatprep.subr.mxu0 0.0
    %2595 = vmatpush2.msra.mxu0 0.0
    %2596 = vmatprep.subr.mxu0 0.0
    %2597 = vmatpush2.msra.mxu0 0.0
    %2598 = vmatprep.subr.mxu0 0.0
    %2599 = vmatpush2.msra.mxu0 0.0
    %2600 = vmatprep.mubr.f32.mxu0 0.0
    %v2601 = vand.u32 %v1942, 4294901760
    %2602 = vmatmul.mubr.f32.gmra.mxu0 %v2601
    %v2603 = vpop.f32.mrf.mxu0
    %v2604 = vadd.f32 %v2517, %v2603
    %v2605 = vpop.f32.mrf.mxu0
    %2606 = vdwg.mxu0
    %2607 = vst [vmem:[#allocation11] sm:$0xff] %v2604
    // Predicated region
    $region58: #{tpu_custom_call.1} parent=1 // pred_check
      _
    $region59: #{tpu_custom_call.1} parent=1 // pred_check_branch
      %2609 = sbr.rel (0) target = $region61
    $region60: #{tpu_custom_call.1} parent=1 // pred_region
      %s2611 = ssub.s32 128, 128
      %2612 = vsyncadd [#allocation4], %s2611
      %s2614 = sshll.u32 [#allocation11], 4
      %s2615 = int_to_ptr.vmem [resolvable:$true] %s2614
      %2617 = dma.vmem_to_hbm [thread:$0]  %s2615, 128, %s9, [#allocation4]
    $region61: #{tpu_custom_call.1} parent=1 // pred_fallthru
      _
    // Predicated region
    $region62: #{tpu_custom_call.1} parent=1 // pred_check
      _
    $region63: #{tpu_custom_call.1} parent=1 // pred_check_branch
      %2619 = sbr.rel (0) target = $region65
    $region64: #{tpu_custom_call.1} parent=1 // pred_region
      %2620 = dma.done [#allocation4], 128
    $region65: #{tpu_custom_call.1} parent=1 // pred_fallthru
      _
    %2621 = vsyncpa [#allocation3], 1
    %2622 = vsyncpa [#allocation6], 1
    %2623 = vsyncpa [#allocation9], 1
    %2624 = vsyncpa [#allocation4], 1

</llo_original>
